<compile_context>
chip_gen: v7x
topology: tpu7x:2x2x1
jax: 0.10.0
libtpu: 0.0.40
codegen_flags: <defaults>
</compile_context>

<pallas_src>
import jax
import jax.numpy as jnp
from jax.experimental import pallas as pl
from jax.experimental.pallas import tpu as pltpu

HIDDEN = 32          # nn.LSTM(hidden_size=32)
OUT_LANE_PAD = 128   # lane-dense output slab width


def _lstm_fc_kernel(x_ref, w_ih_ref, w_hh_ref, b_g_ref, w_fc_ref, b_fc_ref, out_ref):
    """Fused input projection + serial LSTM recurrence + final fc (fully unrolled).

    x_ref   : (T, B, D)  bf16  inputs, time-major
    w_ih_ref: (D, 4H)    bf16  input weights (transposed, gate cols [i|f|o|g])
    w_hh_ref: (H, 4H)    bf16  recurrent weights (transposed, gate cols [i|f|o|g])
    b_g_ref : (1, 4H)    f32   b_ih + b_hh (permuted)
    w_fc_ref: (H, 128)   bf16  fc weights (transposed, zero-padded to 128 lanes)
    b_fc_ref: (1, 128)   f32   fc bias (zero-padded)
    out_ref : (B, 128)   f32   fc(h_T), lane-dense slab
    """
    T, B, _ = x_ref.shape
    G = w_hh_ref.shape[1]
    H = G // 4

    # h/c state stays in f32 (only the MXU operands are cast to bf16).
    h = jnp.zeros((B, H), jnp.float32)
    c = jnp.zeros((B, H), jnp.float32)

    # T is small & static -> full unroll: no per-step grid/pipeline overhead, and
    # the independent x_t @ W_ih matmuls are visible to the scheduler alongside
    # the serial h @ W_hh chain.
    for t in range(T):
        gates = (jnp.dot(x_ref[t], w_ih_ref[...],
                         preferred_element_type=jnp.float32)
                 + jnp.dot(h.astype(jnp.bfloat16), w_hh_ref[...],
                           preferred_element_type=jnp.float32)
                 + b_g_ref[...])                                   # (B, 4H) f32
        # Gate columns were pre-permuted to [i | f | o | g]:
        #   one sigmoid over the first 3H lanes, one tanh over the last H lanes.
        sio = jax.nn.sigmoid(gates[:, :3 * H])
        g_g = jnp.tanh(gates[:, 3 * H:])
        i_g = sio[:, 0 * H:1 * H]
        f_g = sio[:, 1 * H:2 * H]
        o_g = sio[:, 2 * H:3 * H]
        c = f_g * c + i_g * g_g
        h = o_g * jnp.tanh(c)

    # fc on the last hidden state == fc(lstm_out)[:, -1, :] of the PyTorch module.
    out_ref[...] = (jnp.dot(h.astype(jnp.bfloat16), w_fc_ref[...],
                            preferred_element_type=jnp.float32)
                    + b_fc_ref[...]).astype(out_ref.dtype)


@jax.jit
def spatial_ext_lstm_forward(x, w_ih, w_hh, b_ih, b_hh, w_fc, b_fc):
    """x: (B, T, D) float32 (batch_first, like the PyTorch module).

    w_ih: (4H, D), w_hh: (4H, H), b_ih/b_hh: (4H,)   -- PyTorch nn.LSTM layout
    w_fc: (O, H), b_fc: (O,)                         -- PyTorch nn.Linear layout
    returns: (B, O)
    """
    B, T, D = x.shape
    H = HIDDEN
    G = 4 * H
    O = w_fc.shape[0]
    o_pad = max(OUT_LANE_PAD, pl.cdiv(O, 128) * 128)

    # Gate-column permutation: PyTorch [i|f|g|o] -> [i|f|o|g] so the kernel runs a
    # single sigmoid over lanes [0, 3H) and a single tanh over [3H, 4H).
    perm = jnp.concatenate([jnp.arange(0, 2 * H),
                            jnp.arange(3 * H, 4 * H),
                            jnp.arange(2 * H, 3 * H)])

    w_ih_t = jnp.transpose(w_ih)[:, perm].astype(jnp.bfloat16)        # (D, 4H)
    w_hh_t = jnp.transpose(w_hh)[:, perm].astype(jnp.bfloat16)        # (H, 4H)
    b_g = (b_ih + b_hh)[perm].astype(jnp.float32).reshape(1, G)       # (1, 4H)

    # Time-major bf16 inputs: halves HBM->VMEM traffic vs staging an f32
    # pre-activation tensor, and matches the kernel's per-step row access.
    x_tm = jnp.transpose(x, (1, 0, 2)).astype(jnp.bfloat16)           # (T, B, D)

    # fc weights/bias padded to a lane-dense 128-wide output slab (unmasked stores).
    w_fc_t = jnp.pad(jnp.transpose(w_fc).astype(jnp.float32),
                     ((0, 0), (0, o_pad - O))).astype(jnp.bfloat16)   # (H, o_pad)
    b_fc_p = jnp.pad(b_fc.astype(jnp.float32).reshape(1, O),
                     ((0, 0), (0, o_pad - O)))                        # (1, o_pad)

    out_pad = pl.pallas_call(
        _lstm_fc_kernel,
        out_shape=jax.ShapeDtypeStruct((B, o_pad), jnp.float32),
        # Gridless call: every operand is a single whole-array block resident in
        # VMEM (total << 100 KiB, well under even v7x's 64 MiB per-core VMEM), so
        # there is no per-step double-buffering/bookkeeping at all.
        in_specs=[pl.BlockSpec(memory_space=pltpu.MemorySpace.VMEM) for _ in range(6)],
        out_specs=pl.BlockSpec(memory_space=pltpu.MemorySpace.VMEM),
    )(x_tm, w_ih_t, w_hh_t, b_g, w_fc_t, b_fc_p)

    return out_pad[:, :O]


# ----------------------------- references (for self-test) -----------------------------

def _reference_forward(x, w_ih, w_hh, b_ih, b_hh, w_fc, b_fc, mixed=False):
    """Pure-JAX reference matching PyTorch nn.LSTM + nn.Linear semantics.

    mixed=True mirrors the kernel's precision policy exactly (bf16 matmul operands,
    f32 accumulation & state) so the kernel logic can be checked to tight tolerance.
    """
    B, T, D = x.shape
    H = HIDDEN
    cast = (lambda a: a.astype(jnp.bfloat16)) if mixed else (lambda a: a)

    def step(carry, x_t):
        h, c = carry
        gates = (jnp.dot(cast(x_t), cast(w_ih.T), preferred_element_type=jnp.float32)
                 + jnp.dot(cast(h), cast(w_hh.T), preferred_element_type=jnp.float32)
                 + b_ih + b_hh)
        i = jax.nn.sigmoid(gates[:, 0 * H:1 * H])
        f = jax.nn.sigmoid(gates[:, 1 * H:2 * H])
        g = jnp.tanh(gates[:, 2 * H:3 * H])
        o = jax.nn.sigmoid(gates[:, 3 * H:4 * H])
        c = f * c + i * g
        h = o * jnp.tanh(c)
        return (h, c), None

    h0 = jnp.zeros((B, H), jnp.float32)
    c0 = jnp.zeros((B, H), jnp.float32)
    (h_last, _), _ = jax.lax.scan(step, (h0, c0), jnp.transpose(x, (1, 0, 2)))
    return (jnp.dot(cast(h_last), cast(w_fc.T), preferred_element_type=jnp.float32)
            + b_fc)


if __name__ == "__main__":
    B, T = 2, 8
    INPUT_SIZE = 128    # module default input_size=128
    OUTPUT_SIZE = 8     # module default output_size=8
    H = HIDDEN

    key = jax.random.PRNGKey(0)
    ks = jax.random.split(key, 7)
    bound = 1.0 / jnp.sqrt(H)   # PyTorch nn.LSTM / nn.Linear uniform init bound

    x = jax.random.normal(ks[0], (B, T, INPUT_SIZE), dtype=jnp.float32)
    w_ih = jax.random.uniform(ks[1], (4 * H, INPUT_SIZE), minval=-bound, maxval=bound)
    w_hh = jax.random.uniform(ks[2], (4 * H, H), minval=-bound, maxval=bound)
    b_ih = jax.random.uniform(ks[3], (4 * H,), minval=-bound, maxval=bound)
    b_hh = jax.random.uniform(ks[4], (4 * H,), minval=-bound, maxval=bound)
    w_fc = jax.random.uniform(ks[5], (OUTPUT_SIZE, H), minval=-bound, maxval=bound)
    b_fc = jax.random.uniform(ks[6], (OUTPUT_SIZE,), minval=-bound, maxval=bound)

    out = spatial_ext_lstm_forward(x, w_ih, w_hh, b_ih, b_hh, w_fc, b_fc)
    out = jax.block_until_ready(out)
    assert out.shape == (B, OUTPUT_SIZE)

    # Tight check against a reference that uses the same precision policy as the
    # kernel (bf16 matmul operands, f32 accumulation/state): verifies kernel logic.
    ref_mixed = _reference_forward(x, w_ih, w_hh, b_ih, b_hh, w_fc, b_fc, mixed=True)
    assert jnp.allclose(out, ref_mixed, atol=1e-3, rtol=1e-3), (out, ref_mixed)

    # Looser check against the pure-f32 PyTorch-equivalent reference: the gap is
    # only the bf16 operand rounding (accumulation stays f32).
    ref_f32 = _reference_forward(x, w_ih, w_hh, b_ih, b_hh, w_fc, b_fc, mixed=False)
    assert jnp.allclose(out, ref_f32, atol=3e-2, rtol=3e-2), (out, ref_f32)

    print("KERNEL_OK")
</pallas_src>

<mosaic_0001>
module attributes {stable_mosaic.version = 11 : i64} {
  func.func @_lstm_fc_kernel(%arg0: memref<8x2x128xbf16, #tpu.memory_space<vmem>>, %arg1: memref<128x128xbf16, #tpu.memory_space<vmem>>, %arg2: memref<32x128xbf16, #tpu.memory_space<vmem>>, %arg3: memref<1x128xf32, #tpu.memory_space<vmem>>, %arg4: memref<32x128xbf16, #tpu.memory_space<vmem>>, %arg5: memref<1x128xf32, #tpu.memory_space<vmem>>, %arg6: memref<2x128xf32, #tpu.memory_space<vmem>>) attributes {dimension_semantics = [], scalar_prefetch = 0 : i64, scratch_operands = 0 : i64, tpu.core_type = #tpu.core_type<tc>} {
    %cst = arith.constant 0.000000e+00 : f32
    %0 = vector.broadcast %cst : f32 to vector<2x32xf32>
    %cst_0 = arith.constant 0.000000e+00 : f32
    %1 = vector.broadcast %cst_0 : f32 to vector<2x32xf32>
    %c0 = arith.constant 0 : index
    %c0_1 = arith.constant 0 : index
    %c0_2 = arith.constant 0 : index
    %2 = vector.load %arg0[%c0, %c0_1, %c0_2] : memref<8x2x128xbf16, #tpu.memory_space<vmem>>, vector<1x2x128xbf16>
    %3 = vector.shape_cast %2 : vector<1x2x128xbf16> to vector<2x128xbf16>
    %c0_3 = arith.constant 0 : index
    %c0_4 = arith.constant 0 : index
    %4 = vector.load %arg1[%c0_3, %c0_4] : memref<128x128xbf16, #tpu.memory_space<vmem>>, vector<128x128xbf16>
    %cst_5 = arith.constant dense<0.000000e+00> : vector<2x128xf32>
    %5 = tpu.matmul %3, %4, %cst_5 {dimension_numbers = #tpu.dot_dimension_numbers<[1], [0], [0], [1], [0, 0, 1, 1], [], []>} : vector<2x128xbf16>, vector<128x128xbf16>, vector<2x128xf32> -> vector<2x128xf32>
    %6 = arith.truncf %0 : vector<2x32xf32> to vector<2x32xbf16>
    %c0_6 = arith.constant 0 : index
    %c0_7 = arith.constant 0 : index
    %7 = vector.load %arg2[%c0_6, %c0_7] : memref<32x128xbf16, #tpu.memory_space<vmem>>, vector<32x128xbf16>
    %cst_8 = arith.constant dense<0.000000e+00> : vector<2x128xf32>
    %8 = tpu.matmul %6, %7, %cst_8 {dimension_numbers = #tpu.dot_dimension_numbers<[1], [0], [0], [1], [0, 0, 1, 1], [], []>} : vector<2x32xbf16>, vector<32x128xbf16>, vector<2x128xf32> -> vector<2x128xf32>
    %9 = arith.addf %5, %8 : vector<2x128xf32>
    %c0_9 = arith.constant 0 : index
    %c0_10 = arith.constant 0 : index
    %10 = vector.load %arg3[%c0_9, %c0_10] : memref<1x128xf32, #tpu.memory_space<vmem>>, vector<1x128xf32>
    %11 = vector.broadcast %10 : vector<1x128xf32> to vector<2x128xf32>
    %12 = arith.addf %9, %11 : vector<2x128xf32>
    %13 = vector.extract_strided_slice %12 {offsets = [0, 0], sizes = [2, 96], strides = [1, 1]} : vector<2x128xf32> to vector<2x96xf32>
    %14 = arith.negf %13 : vector<2x96xf32>
    %15 = math.exp %14 : vector<2x96xf32>
    %cst_11 = arith.constant 1.000000e+00 : f32
    %16 = vector.broadcast %cst_11 : f32 to vector<2x96xf32>
    %17 = arith.addf %16, %15 : vector<2x96xf32>
    %18 = arith.divf %16, %17 : vector<2x96xf32>
    %19 = vector.extract_strided_slice %12 {offsets = [0, 96], sizes = [2, 32], strides = [1, 1]} : vector<2x128xf32> to vector<2x32xf32>
    %20 = math.tanh %19 : vector<2x32xf32>
    %21 = vector.extract_strided_slice %18 {offsets = [0, 0], sizes = [2, 32], strides = [1, 1]} : vector<2x96xf32> to vector<2x32xf32>
    %22 = vector.extract_strided_slice %18 {offsets = [0, 32], sizes = [2, 32], strides = [1, 1]} : vector<2x96xf32> to vector<2x32xf32>
    %23 = vector.extract_strided_slice %18 {offsets = [0, 64], sizes = [2, 32], strides = [1, 1]} : vector<2x96xf32> to vector<2x32xf32>
    %24 = arith.mulf %22, %1 : vector<2x32xf32>
    %25 = arith.mulf %21, %20 : vector<2x32xf32>
    %26 = arith.addf %24, %25 : vector<2x32xf32>
    %27 = math.tanh %26 : vector<2x32xf32>
    %28 = arith.mulf %23, %27 : vector<2x32xf32>
    %c1 = arith.constant 1 : index
    %c0_12 = arith.constant 0 : index
    %c0_13 = arith.constant 0 : index
    %29 = vector.load %arg0[%c1, %c0_12, %c0_13] : memref<8x2x128xbf16, #tpu.memory_space<vmem>>, vector<1x2x128xbf16>
    %30 = vector.shape_cast %29 : vector<1x2x128xbf16> to vector<2x128xbf16>
    %c0_14 = arith.constant 0 : index
    %c0_15 = arith.constant 0 : index
    %31 = vector.load %arg1[%c0_14, %c0_15] : memref<128x128xbf16, #tpu.memory_space<vmem>>, vector<128x128xbf16>
    %cst_16 = arith.constant dense<0.000000e+00> : vector<2x128xf32>
    %32 = tpu.matmul %30, %31, %cst_16 {dimension_numbers = #tpu.dot_dimension_numbers<[1], [0], [0], [1], [0, 0, 1, 1], [], []>} : vector<2x128xbf16>, vector<128x128xbf16>, vector<2x128xf32> -> vector<2x128xf32>
    %33 = arith.truncf %28 : vector<2x32xf32> to vector<2x32xbf16>
    %c0_17 = arith.constant 0 : index
    %c0_18 = arith.constant 0 : index
    %34 = vector.load %arg2[%c0_17, %c0_18] : memref<32x128xbf16, #tpu.memory_space<vmem>>, vector<32x128xbf16>
    %cst_19 = arith.constant dense<0.000000e+00> : vector<2x128xf32>
    %35 = tpu.matmul %33, %34, %cst_19 {dimension_numbers = #tpu.dot_dimension_numbers<[1], [0], [0], [1], [0, 0, 1, 1], [], []>} : vector<2x32xbf16>, vector<32x128xbf16>, vector<2x128xf32> -> vector<2x128xf32>
    %36 = arith.addf %32, %35 : vector<2x128xf32>
    %c0_20 = arith.constant 0 : index
    %c0_21 = arith.constant 0 : index
    %37 = vector.load %arg3[%c0_20, %c0_21] : memref<1x128xf32, #tpu.memory_space<vmem>>, vector<1x128xf32>
    %38 = vector.broadcast %37 : vector<1x128xf32> to vector<2x128xf32>
    %39 = arith.addf %36, %38 : vector<2x128xf32>
    %40 = vector.extract_strided_slice %39 {offsets = [0, 0], sizes = [2, 96], strides = [1, 1]} : vector<2x128xf32> to vector<2x96xf32>
    %41 = arith.negf %40 : vector<2x96xf32>
    %42 = math.exp %41 : vector<2x96xf32>
    %cst_22 = arith.constant 1.000000e+00 : f32
    %43 = vector.broadcast %cst_22 : f32 to vector<2x96xf32>
    %44 = arith.addf %43, %42 : vector<2x96xf32>
    %45 = arith.divf %43, %44 : vector<2x96xf32>
    %46 = vector.extract_strided_slice %39 {offsets = [0, 96], sizes = [2, 32], strides = [1, 1]} : vector<2x128xf32> to vector<2x32xf32>
    %47 = math.tanh %46 : vector<2x32xf32>
    %48 = vector.extract_strided_slice %45 {offsets = [0, 0], sizes = [2, 32], strides = [1, 1]} : vector<2x96xf32> to vector<2x32xf32>
    %49 = vector.extract_strided_slice %45 {offsets = [0, 32], sizes = [2, 32], strides = [1, 1]} : vector<2x96xf32> to vector<2x32xf32>
    %50 = vector.extract_strided_slice %45 {offsets = [0, 64], sizes = [2, 32], strides = [1, 1]} : vector<2x96xf32> to vector<2x32xf32>
    %51 = arith.mulf %49, %26 : vector<2x32xf32>
    %52 = arith.mulf %48, %47 : vector<2x32xf32>
    %53 = arith.addf %51, %52 : vector<2x32xf32>
    %54 = math.tanh %53 : vector<2x32xf32>
    %55 = arith.mulf %50, %54 : vector<2x32xf32>
    %c2 = arith.constant 2 : index
    %c0_23 = arith.constant 0 : index
    %c0_24 = arith.constant 0 : index
    %56 = vector.load %arg0[%c2, %c0_23, %c0_24] : memref<8x2x128xbf16, #tpu.memory_space<vmem>>, vector<1x2x128xbf16>
    %57 = vector.shape_cast %56 : vector<1x2x128xbf16> to vector<2x128xbf16>
    %c0_25 = arith.constant 0 : index
    %c0_26 = arith.constant 0 : index
    %58 = vector.load %arg1[%c0_25, %c0_26] : memref<128x128xbf16, #tpu.memory_space<vmem>>, vector<128x128xbf16>
    %cst_27 = arith.constant dense<0.000000e+00> : vector<2x128xf32>
    %59 = tpu.matmul %57, %58, %cst_27 {dimension_numbers = #tpu.dot_dimension_numbers<[1], [0], [0], [1], [0, 0, 1, 1], [], []>} : vector<2x128xbf16>, vector<128x128xbf16>, vector<2x128xf32> -> vector<2x128xf32>
    %60 = arith.truncf %55 : vector<2x32xf32> to vector<2x32xbf16>
    %c0_28 = arith.constant 0 : index
    %c0_29 = arith.constant 0 : index
    %61 = vector.load %arg2[%c0_28, %c0_29] : memref<32x128xbf16, #tpu.memory_space<vmem>>, vector<32x128xbf16>
    %cst_30 = arith.constant dense<0.000000e+00> : vector<2x128xf32>
    %62 = tpu.matmul %60, %61, %cst_30 {dimension_numbers = #tpu.dot_dimension_numbers<[1], [0], [0], [1], [0, 0, 1, 1], [], []>} : vector<2x32xbf16>, vector<32x128xbf16>, vector<2x128xf32> -> vector<2x128xf32>
    %63 = arith.addf %59, %62 : vector<2x128xf32>
    %c0_31 = arith.constant 0 : index
    %c0_32 = arith.constant 0 : index
    %64 = vector.load %arg3[%c0_31, %c0_32] : memref<1x128xf32, #tpu.memory_space<vmem>>, vector<1x128xf32>
    %65 = vector.broadcast %64 : vector<1x128xf32> to vector<2x128xf32>
    %66 = arith.addf %63, %65 : vector<2x128xf32>
    %67 = vector.extract_strided_slice %66 {offsets = [0, 0], sizes = [2, 96], strides = [1, 1]} : vector<2x128xf32> to vector<2x96xf32>
    %68 = arith.negf %67 : vector<2x96xf32>
    %69 = math.exp %68 : vector<2x96xf32>
    %cst_33 = arith.constant 1.000000e+00 : f32
    %70 = vector.broadcast %cst_33 : f32 to vector<2x96xf32>
    %71 = arith.addf %70, %69 : vector<2x96xf32>
    %72 = arith.divf %70, %71 : vector<2x96xf32>
    %73 = vector.extract_strided_slice %66 {offsets = [0, 96], sizes = [2, 32], strides = [1, 1]} : vector<2x128xf32> to vector<2x32xf32>
    %74 = math.tanh %73 : vector<2x32xf32>
    %75 = vector.extract_strided_slice %72 {offsets = [0, 0], sizes = [2, 32], strides = [1, 1]} : vector<2x96xf32> to vector<2x32xf32>
    %76 = vector.extract_strided_slice %72 {offsets = [0, 32], sizes = [2, 32], strides = [1, 1]} : vector<2x96xf32> to vector<2x32xf32>
    %77 = vector.extract_strided_slice %72 {offsets = [0, 64], sizes = [2, 32], strides = [1, 1]} : vector<2x96xf32> to vector<2x32xf32>
    %78 = arith.mulf %76, %53 : vector<2x32xf32>
    %79 = arith.mulf %75, %74 : vector<2x32xf32>
    %80 = arith.addf %78, %79 : vector<2x32xf32>
    %81 = math.tanh %80 : vector<2x32xf32>
    %82 = arith.mulf %77, %81 : vector<2x32xf32>
    %c3 = arith.constant 3 : index
    %c0_34 = arith.constant 0 : index
    %c0_35 = arith.constant 0 : index
    %83 = vector.load %arg0[%c3, %c0_34, %c0_35] : memref<8x2x128xbf16, #tpu.memory_space<vmem>>, vector<1x2x128xbf16>
    %84 = vector.shape_cast %83 : vector<1x2x128xbf16> to vector<2x128xbf16>
    %c0_36 = arith.constant 0 : index
    %c0_37 = arith.constant 0 : index
    %85 = vector.load %arg1[%c0_36, %c0_37] : memref<128x128xbf16, #tpu.memory_space<vmem>>, vector<128x128xbf16>
    %cst_38 = arith.constant dense<0.000000e+00> : vector<2x128xf32>
    %86 = tpu.matmul %84, %85, %cst_38 {dimension_numbers = #tpu.dot_dimension_numbers<[1], [0], [0], [1], [0, 0, 1, 1], [], []>} : vector<2x128xbf16>, vector<128x128xbf16>, vector<2x128xf32> -> vector<2x128xf32>
    %87 = arith.truncf %82 : vector<2x32xf32> to vector<2x32xbf16>
    %c0_39 = arith.constant 0 : index
    %c0_40 = arith.constant 0 : index
    %88 = vector.load %arg2[%c0_39, %c0_40] : memref<32x128xbf16, #tpu.memory_space<vmem>>, vector<32x128xbf16>
    %cst_41 = arith.constant dense<0.000000e+00> : vector<2x128xf32>
    %89 = tpu.matmul %87, %88, %cst_41 {dimension_numbers = #tpu.dot_dimension_numbers<[1], [0], [0], [1], [0, 0, 1, 1], [], []>} : vector<2x32xbf16>, vector<32x128xbf16>, vector<2x128xf32> -> vector<2x128xf32>
    %90 = arith.addf %86, %89 : vector<2x128xf32>
    %c0_42 = arith.constant 0 : index
    %c0_43 = arith.constant 0 : index
    %91 = vector.load %arg3[%c0_42, %c0_43] : memref<1x128xf32, #tpu.memory_space<vmem>>, vector<1x128xf32>
    %92 = vector.broadcast %91 : vector<1x128xf32> to vector<2x128xf32>
    %93 = arith.addf %90, %92 : vector<2x128xf32>
    %94 = vector.extract_strided_slice %93 {offsets = [0, 0], sizes = [2, 96], strides = [1, 1]} : vector<2x128xf32> to vector<2x96xf32>
    %95 = arith.negf %94 : vector<2x96xf32>
    %96 = math.exp %95 : vector<2x96xf32>
    %cst_44 = arith.constant 1.000000e+00 : f32
    %97 = vector.broadcast %cst_44 : f32 to vector<2x96xf32>
    %98 = arith.addf %97, %96 : vector<2x96xf32>
    %99 = arith.divf %97, %98 : vector<2x96xf32>
    %100 = vector.extract_strided_slice %93 {offsets = [0, 96], sizes = [2, 32], strides = [1, 1]} : vector<2x128xf32> to vector<2x32xf32>
    %101 = math.tanh %100 : vector<2x32xf32>
    %102 = vector.extract_strided_slice %99 {offsets = [0, 0], sizes = [2, 32], strides = [1, 1]} : vector<2x96xf32> to vector<2x32xf32>
    %103 = vector.extract_strided_slice %99 {offsets = [0, 32], sizes = [2, 32], strides = [1, 1]} : vector<2x96xf32> to vector<2x32xf32>
    %104 = vector.extract_strided_slice %99 {offsets = [0, 64], sizes = [2, 32], strides = [1, 1]} : vector<2x96xf32> to vector<2x32xf32>
    %105 = arith.mulf %103, %80 : vector<2x32xf32>
    %106 = arith.mulf %102, %101 : vector<2x32xf32>
    %107 = arith.addf %105, %106 : vector<2x32xf32>
    %108 = math.tanh %107 : vector<2x32xf32>
    %109 = arith.mulf %104, %108 : vector<2x32xf32>
    %c4 = arith.constant 4 : index
    %c0_45 = arith.constant 0 : index
    %c0_46 = arith.constant 0 : index
    %110 = vector.load %arg0[%c4, %c0_45, %c0_46] : memref<8x2x128xbf16, #tpu.memory_space<vmem>>, vector<1x2x128xbf16>
    %111 = vector.shape_cast %110 : vector<1x2x128xbf16> to vector<2x128xbf16>
    %c0_47 = arith.constant 0 : index
    %c0_48 = arith.constant 0 : index
    %112 = vector.load %arg1[%c0_47, %c0_48] : memref<128x128xbf16, #tpu.memory_space<vmem>>, vector<128x128xbf16>
    %cst_49 = arith.constant dense<0.000000e+00> : vector<2x128xf32>
    %113 = tpu.matmul %111, %112, %cst_49 {dimension_numbers = #tpu.dot_dimension_numbers<[1], [0], [0], [1], [0, 0, 1, 1], [], []>} : vector<2x128xbf16>, vector<128x128xbf16>, vector<2x128xf32> -> vector<2x128xf32>
    %114 = arith.truncf %109 : vector<2x32xf32> to vector<2x32xbf16>
    %c0_50 = arith.constant 0 : index
    %c0_51 = arith.constant 0 : index
    %115 = vector.load %arg2[%c0_50, %c0_51] : memref<32x128xbf16, #tpu.memory_space<vmem>>, vector<32x128xbf16>
    %cst_52 = arith.constant dense<0.000000e+00> : vector<2x128xf32>
    %116 = tpu.matmul %114, %115, %cst_52 {dimension_numbers = #tpu.dot_dimension_numbers<[1], [0], [0], [1], [0, 0, 1, 1], [], []>} : vector<2x32xbf16>, vector<32x128xbf16>, vector<2x128xf32> -> vector<2x128xf32>
    %117 = arith.addf %113, %116 : vector<2x128xf32>
    %c0_53 = arith.constant 0 : index
    %c0_54 = arith.constant 0 : index
    %118 = vector.load %arg3[%c0_53, %c0_54] : memref<1x128xf32, #tpu.memory_space<vmem>>, vector<1x128xf32>
    %119 = vector.broadcast %118 : vector<1x128xf32> to vector<2x128xf32>
    %120 = arith.addf %117, %119 : vector<2x128xf32>
    %121 = vector.extract_strided_slice %120 {offsets = [0, 0], sizes = [2, 96], strides = [1, 1]} : vector<2x128xf32> to vector<2x96xf32>
    %122 = arith.negf %121 : vector<2x96xf32>
    %123 = math.exp %122 : vector<2x96xf32>
    %cst_55 = arith.constant 1.000000e+00 : f32
    %124 = vector.broadcast %cst_55 : f32 to vector<2x96xf32>
    %125 = arith.addf %124, %123 : vector<2x96xf32>
    %126 = arith.divf %124, %125 : vector<2x96xf32>
    %127 = vector.extract_strided_slice %120 {offsets = [0, 96], sizes = [2, 32], strides = [1, 1]} : vector<2x128xf32> to vector<2x32xf32>
    %128 = math.tanh %127 : vector<2x32xf32>
    %129 = vector.extract_strided_slice %126 {offsets = [0, 0], sizes = [2, 32], strides = [1, 1]} : vector<2x96xf32> to vector<2x32xf32>
    %130 = vector.extract_strided_slice %126 {offsets = [0, 32], sizes = [2, 32], strides = [1, 1]} : vector<2x96xf32> to vector<2x32xf32>
    %131 = vector.extract_strided_slice %126 {offsets = [0, 64], sizes = [2, 32], strides = [1, 1]} : vector<2x96xf32> to vector<2x32xf32>
    %132 = arith.mulf %130, %107 : vector<2x32xf32>
    %133 = arith.mulf %129, %128 : vector<2x32xf32>
    %134 = arith.addf %132, %133 : vector<2x32xf32>
    %135 = math.tanh %134 : vector<2x32xf32>
    %136 = arith.mulf %131, %135 : vector<2x32xf32>
    %c5 = arith.constant 5 : index
    %c0_56 = arith.constant 0 : index
    %c0_57 = arith.constant 0 : index
    %137 = vector.load %arg0[%c5, %c0_56, %c0_57] : memref<8x2x128xbf16, #tpu.memory_space<vmem>>, vector<1x2x128xbf16>
    %138 = vector.shape_cast %137 : vector<1x2x128xbf16> to vector<2x128xbf16>
    %c0_58 = arith.constant 0 : index
    %c0_59 = arith.constant 0 : index
    %139 = vector.load %arg1[%c0_58, %c0_59] : memref<128x128xbf16, #tpu.memory_space<vmem>>, vector<128x128xbf16>
    %cst_60 = arith.constant dense<0.000000e+00> : vector<2x128xf32>
    %140 = tpu.matmul %138, %139, %cst_60 {dimension_numbers = #tpu.dot_dimension_numbers<[1], [0], [0], [1], [0, 0, 1, 1], [], []>} : vector<2x128xbf16>, vector<128x128xbf16>, vector<2x128xf32> -> vector<2x128xf32>
    %141 = arith.truncf %136 : vector<2x32xf32> to vector<2x32xbf16>
    %c0_61 = arith.constant 0 : index
    %c0_62 = arith.constant 0 : index
    %142 = vector.load %arg2[%c0_61, %c0_62] : memref<32x128xbf16, #tpu.memory_space<vmem>>, vector<32x128xbf16>
    %cst_63 = arith.constant dense<0.000000e+00> : vector<2x128xf32>
    %143 = tpu.matmul %141, %142, %cst_63 {dimension_numbers = #tpu.dot_dimension_numbers<[1], [0], [0], [1], [0, 0, 1, 1], [], []>} : vector<2x32xbf16>, vector<32x128xbf16>, vector<2x128xf32> -> vector<2x128xf32>
    %144 = arith.addf %140, %143 : vector<2x128xf32>
    %c0_64 = arith.constant 0 : index
    %c0_65 = arith.constant 0 : index
    %145 = vector.load %arg3[%c0_64, %c0_65] : memref<1x128xf32, #tpu.memory_space<vmem>>, vector<1x128xf32>
    %146 = vector.broadcast %145 : vector<1x128xf32> to vector<2x128xf32>
    %147 = arith.addf %144, %146 : vector<2x128xf32>
    %148 = vector.extract_strided_slice %147 {offsets = [0, 0], sizes = [2, 96], strides = [1, 1]} : vector<2x128xf32> to vector<2x96xf32>
    %149 = arith.negf %148 : vector<2x96xf32>
    %150 = math.exp %149 : vector<2x96xf32>
    %cst_66 = arith.constant 1.000000e+00 : f32
    %151 = vector.broadcast %cst_66 : f32 to vector<2x96xf32>
    %152 = arith.addf %151, %150 : vector<2x96xf32>
    %153 = arith.divf %151, %152 : vector<2x96xf32>
    %154 = vector.extract_strided_slice %147 {offsets = [0, 96], sizes = [2, 32], strides = [1, 1]} : vector<2x128xf32> to vector<2x32xf32>
    %155 = math.tanh %154 : vector<2x32xf32>
    %156 = vector.extract_strided_slice %153 {offsets = [0, 0], sizes = [2, 32], strides = [1, 1]} : vector<2x96xf32> to vector<2x32xf32>
    %157 = vector.extract_strided_slice %153 {offsets = [0, 32], sizes = [2, 32], strides = [1, 1]} : vector<2x96xf32> to vector<2x32xf32>
    %158 = vector.extract_strided_slice %153 {offsets = [0, 64], sizes = [2, 32], strides = [1, 1]} : vector<2x96xf32> to vector<2x32xf32>
    %159 = arith.mulf %157, %134 : vector<2x32xf32>
    %160 = arith.mulf %156, %155 : vector<2x32xf32>
    %161 = arith.addf %159, %160 : vector<2x32xf32>
    %162 = math.tanh %161 : vector<2x32xf32>
    %163 = arith.mulf %158, %162 : vector<2x32xf32>
    %c6 = arith.constant 6 : index
    %c0_67 = arith.constant 0 : index
    %c0_68 = arith.constant 0 : index
    %164 = vector.load %arg0[%c6, %c0_67, %c0_68] : memref<8x2x128xbf16, #tpu.memory_space<vmem>>, vector<1x2x128xbf16>
    %165 = vector.shape_cast %164 : vector<1x2x128xbf16> to vector<2x128xbf16>
    %c0_69 = arith.constant 0 : index
    %c0_70 = arith.constant 0 : index
    %166 = vector.load %arg1[%c0_69, %c0_70] : memref<128x128xbf16, #tpu.memory_space<vmem>>, vector<128x128xbf16>
    %cst_71 = arith.constant dense<0.000000e+00> : vector<2x128xf32>
    %167 = tpu.matmul %165, %166, %cst_71 {dimension_numbers = #tpu.dot_dimension_numbers<[1], [0], [0], [1], [0, 0, 1, 1], [], []>} : vector<2x128xbf16>, vector<128x128xbf16>, vector<2x128xf32> -> vector<2x128xf32>
    %168 = arith.truncf %163 : vector<2x32xf32> to vector<2x32xbf16>
    %c0_72 = arith.constant 0 : index
    %c0_73 = arith.constant 0 : index
    %169 = vector.load %arg2[%c0_72, %c0_73] : memref<32x128xbf16, #tpu.memory_space<vmem>>, vector<32x128xbf16>
    %cst_74 = arith.constant dense<0.000000e+00> : vector<2x128xf32>
    %170 = tpu.matmul %168, %169, %cst_74 {dimension_numbers = #tpu.dot_dimension_numbers<[1], [0], [0], [1], [0, 0, 1, 1], [], []>} : vector<2x32xbf16>, vector<32x128xbf16>, vector<2x128xf32> -> vector<2x128xf32>
    %171 = arith.addf %167, %170 : vector<2x128xf32>
    %c0_75 = arith.constant 0 : index
    %c0_76 = arith.constant 0 : index
    %172 = vector.load %arg3[%c0_75, %c0_76] : memref<1x128xf32, #tpu.memory_space<vmem>>, vector<1x128xf32>
    %173 = vector.broadcast %172 : vector<1x128xf32> to vector<2x128xf32>
    %174 = arith.addf %171, %173 : vector<2x128xf32>
    %175 = vector.extract_strided_slice %174 {offsets = [0, 0], sizes = [2, 96], strides = [1, 1]} : vector<2x128xf32> to vector<2x96xf32>
    %176 = arith.negf %175 : vector<2x96xf32>
    %177 = math.exp %176 : vector<2x96xf32>
    %cst_77 = arith.constant 1.000000e+00 : f32
    %178 = vector.broadcast %cst_77 : f32 to vector<2x96xf32>
    %179 = arith.addf %178, %177 : vector<2x96xf32>
    %180 = arith.divf %178, %179 : vector<2x96xf32>
    %181 = vector.extract_strided_slice %174 {offsets = [0, 96], sizes = [2, 32], strides = [1, 1]} : vector<2x128xf32> to vector<2x32xf32>
    %182 = math.tanh %181 : vector<2x32xf32>
    %183 = vector.extract_strided_slice %180 {offsets = [0, 0], sizes = [2, 32], strides = [1, 1]} : vector<2x96xf32> to vector<2x32xf32>
    %184 = vector.extract_strided_slice %180 {offsets = [0, 32], sizes = [2, 32], strides = [1, 1]} : vector<2x96xf32> to vector<2x32xf32>
    %185 = vector.extract_strided_slice %180 {offsets = [0, 64], sizes = [2, 32], strides = [1, 1]} : vector<2x96xf32> to vector<2x32xf32>
    %186 = arith.mulf %184, %161 : vector<2x32xf32>
    %187 = arith.mulf %183, %182 : vector<2x32xf32>
    %188 = arith.addf %186, %187 : vector<2x32xf32>
    %189 = math.tanh %188 : vector<2x32xf32>
    %190 = arith.mulf %185, %189 : vector<2x32xf32>
    %c7 = arith.constant 7 : index
    %c0_78 = arith.constant 0 : index
    %c0_79 = arith.constant 0 : index
    %191 = vector.load %arg0[%c7, %c0_78, %c0_79] : memref<8x2x128xbf16, #tpu.memory_space<vmem>>, vector<1x2x128xbf16>
    %192 = vector.shape_cast %191 : vector<1x2x128xbf16> to vector<2x128xbf16>
    %c0_80 = arith.constant 0 : index
    %c0_81 = arith.constant 0 : index
    %193 = vector.load %arg1[%c0_80, %c0_81] : memref<128x128xbf16, #tpu.memory_space<vmem>>, vector<128x128xbf16>
    %cst_82 = arith.constant dense<0.000000e+00> : vector<2x128xf32>
    %194 = tpu.matmul %192, %193, %cst_82 {dimension_numbers = #tpu.dot_dimension_numbers<[1], [0], [0], [1], [0, 0, 1, 1], [], []>} : vector<2x128xbf16>, vector<128x128xbf16>, vector<2x128xf32> -> vector<2x128xf32>
    %195 = arith.truncf %190 : vector<2x32xf32> to vector<2x32xbf16>
    %c0_83 = arith.constant 0 : index
    %c0_84 = arith.constant 0 : index
    %196 = vector.load %arg2[%c0_83, %c0_84] : memref<32x128xbf16, #tpu.memory_space<vmem>>, vector<32x128xbf16>
    %cst_85 = arith.constant dense<0.000000e+00> : vector<2x128xf32>
    %197 = tpu.matmul %195, %196, %cst_85 {dimension_numbers = #tpu.dot_dimension_numbers<[1], [0], [0], [1], [0, 0, 1, 1], [], []>} : vector<2x32xbf16>, vector<32x128xbf16>, vector<2x128xf32> -> vector<2x128xf32>
    %198 = arith.addf %194, %197 : vector<2x128xf32>
    %c0_86 = arith.constant 0 : index
    %c0_87 = arith.constant 0 : index
    %199 = vector.load %arg3[%c0_86, %c0_87] : memref<1x128xf32, #tpu.memory_space<vmem>>, vector<1x128xf32>
    %200 = vector.broadcast %199 : vector<1x128xf32> to vector<2x128xf32>
    %201 = arith.addf %198, %200 : vector<2x128xf32>
    %202 = vector.extract_strided_slice %201 {offsets = [0, 0], sizes = [2, 96], strides = [1, 1]} : vector<2x128xf32> to vector<2x96xf32>
    %203 = arith.negf %202 : vector<2x96xf32>
    %204 = math.exp %203 : vector<2x96xf32>
    %cst_88 = arith.constant 1.000000e+00 : f32
    %205 = vector.broadcast %cst_88 : f32 to vector<2x96xf32>
    %206 = arith.addf %205, %204 : vector<2x96xf32>
    %207 = arith.divf %205, %206 : vector<2x96xf32>
    %208 = vector.extract_strided_slice %201 {offsets = [0, 96], sizes = [2, 32], strides = [1, 1]} : vector<2x128xf32> to vector<2x32xf32>
    %209 = math.tanh %208 : vector<2x32xf32>
    %210 = vector.extract_strided_slice %207 {offsets = [0, 0], sizes = [2, 32], strides = [1, 1]} : vector<2x96xf32> to vector<2x32xf32>
    %211 = vector.extract_strided_slice %207 {offsets = [0, 32], sizes = [2, 32], strides = [1, 1]} : vector<2x96xf32> to vector<2x32xf32>
    %212 = vector.extract_strided_slice %207 {offsets = [0, 64], sizes = [2, 32], strides = [1, 1]} : vector<2x96xf32> to vector<2x32xf32>
    %213 = arith.mulf %211, %188 : vector<2x32xf32>
    %214 = arith.mulf %210, %209 : vector<2x32xf32>
    %215 = arith.addf %213, %214 : vector<2x32xf32>
    %216 = math.tanh %215 : vector<2x32xf32>
    %217 = arith.mulf %212, %216 : vector<2x32xf32>
    %218 = arith.truncf %217 : vector<2x32xf32> to vector<2x32xbf16>
    %c0_89 = arith.constant 0 : index
    %c0_90 = arith.constant 0 : index
    %219 = vector.load %arg4[%c0_89, %c0_90] : memref<32x128xbf16, #tpu.memory_space<vmem>>, vector<32x128xbf16>
    %cst_91 = arith.constant dense<0.000000e+00> : vector<2x128xf32>
    %220 = tpu.matmul %218, %219, %cst_91 {dimension_numbers = #tpu.dot_dimension_numbers<[1], [0], [0], [1], [0, 0, 1, 1], [], []>} : vector<2x32xbf16>, vector<32x128xbf16>, vector<2x128xf32> -> vector<2x128xf32>
    %c0_92 = arith.constant 0 : index
    %c0_93 = arith.constant 0 : index
    %221 = vector.load %arg5[%c0_92, %c0_93] : memref<1x128xf32, #tpu.memory_space<vmem>>, vector<1x128xf32>
    %222 = vector.broadcast %221 : vector<1x128xf32> to vector<2x128xf32>
    %223 = arith.addf %220, %222 : vector<2x128xf32>
    %c0_94 = arith.constant 0 : index
    %c0_95 = arith.constant 0 : index
    %224 = vector.load %arg6[%c0_94, %c0_95] : memref<2x128xf32, #tpu.memory_space<vmem>>, vector<2x128xf32>
    tpu.vector_store %arg6[%c0_94, %c0_95], %223 {strides = array<i32>} : memref<2x128xf32, #tpu.memory_space<vmem>>, vector<2x128xf32>,
    return
  }
}

</mosaic_0001>

<llo_original>
// kernel: spatial_ext_lstm_forward.1
$region0: #{spatial_ext_lstm_forward.1}
  #allocation0 [shape = 'u32[]', space=smem, size = 0x4, offset = 0x4, fixed_abs, tag = 'smem constant byte address 0x4 - core index']
  #allocation1 [shape = 'u32[144,128]{1,0:T(1,128)}', space=vmem, size = 0x12000, scoped, tag = 'internal scratch']
  %s0 = inlined_call_operand.vmem [shape: bf16[8,2,128], index: 0, kind: input, shape index: {}]
  %s1 = inlined_call_operand.vmem [shape: bf16[128,128], index: 1, kind: input, shape index: {}]
  %s2 = inlined_call_operand.vmem [shape: bf16[32,128], index: 2, kind: input, shape index: {}]
  %s3 = inlined_call_operand.vmem [shape: f32[1,128], index: 3, kind: input, shape index: {}]
  %s4 = inlined_call_operand.vmem [shape: bf16[32,128], index: 4, kind: input, shape index: {}]
  %s5 = inlined_call_operand.vmem [shape: f32[1,128], index: 5, kind: input, shape index: {}]
  %s6 = inlined_call_operand.hbm [shape: f32[2,128], index: 6, kind: output, shape index: {}]
  %s7 = sld [smem:[#allocation0]]
  $region34: #{spatial_ext_lstm_forward.1} parent=0
    _
  %s9 = ssub.s32 1, %s7
  %s10 = scalar_select 0, %s9, %s7
  $region1: #{spatial_ext_lstm_forward.1} parent=0
    #allocation2 [shape = 'u8[1024]{0}', space=vmem, size = 0x400, scoped, tag = 'output window, operand 0, single buffered']
    #allocation3 [shape = 's32[1]{0}', space=sflag, size = 0x4, scoped, tag = 'scoped memory for spatial_ext_lstm_forward.1']
    %11 = vsyncpa [#allocation3], 0
    // Predicated region
    $region2: #{spatial_ext_lstm_forward.1} parent=1 // pred_check
      _
    $region3: #{spatial_ext_lstm_forward.1} parent=1 // pred_check_branch
      %13 = sbr.rel (0) target = $region5
    $region4: #{spatial_ext_lstm_forward.1} parent=1 // pred_region
      _
    $region5: #{spatial_ext_lstm_forward.1} parent=1 // pred_fallthru
      _
    // Predicated region
    $region6: #{spatial_ext_lstm_forward.1} parent=1 // pred_check
      _
    $region7: #{spatial_ext_lstm_forward.1} parent=1 // pred_check_branch
      %15 = sbr.rel (0) target = $region9
    $region8: #{spatial_ext_lstm_forward.1} parent=1 // pred_region
      _
    $region9: #{spatial_ext_lstm_forward.1} parent=1 // pred_fallthru
      _
    // Predicated region
    $region10: #{spatial_ext_lstm_forward.1} parent=1 // pred_check
      _
    $region11: #{spatial_ext_lstm_forward.1} parent=1 // pred_check_branch
      %17 = sbr.rel (0) target = $region13
    $region12: #{spatial_ext_lstm_forward.1} parent=1 // pred_region
      _
    $region13: #{spatial_ext_lstm_forward.1} parent=1 // pred_fallthru
      _
    // Predicated region
    $region14: #{spatial_ext_lstm_forward.1} parent=1 // pred_check
      _
    $region15: #{spatial_ext_lstm_forward.1} parent=1 // pred_check_branch
      %19 = sbr.rel (0) target = $region17
    $region16: #{spatial_ext_lstm_forward.1} parent=1 // pred_region
      _
    $region17: #{spatial_ext_lstm_forward.1} parent=1 // pred_fallthru
      _
    // Predicated region
    $region18: #{spatial_ext_lstm_forward.1} parent=1 // pred_check
      _
    $region19: #{spatial_ext_lstm_forward.1} parent=1 // pred_check_branch
      %21 = sbr.rel (0) target = $region21
    $region20: #{spatial_ext_lstm_forward.1} parent=1 // pred_region
      _
    $region21: #{spatial_ext_lstm_forward.1} parent=1 // pred_fallthru
      _
    // Predicated region
    $region22: #{spatial_ext_lstm_forward.1} parent=1 // pred_check
      _
    $region23: #{spatial_ext_lstm_forward.1} parent=1 // pred_check_branch
      %23 = sbr.rel (0) target = $region25
    $region24: #{spatial_ext_lstm_forward.1} parent=1 // pred_region
      _
    $region25: #{spatial_ext_lstm_forward.1} parent=1 // pred_fallthru
      _
    %v25 = vld [vmem:[%s0] sm:$0x1]
    %v26 = vld [vmem:[%s1] sm:$0xf]
    %v27 = vld [vmem:[%s1 + $0x4] sm:$0xf]
    %v28 = vld [vmem:[%s1 + $0x8] sm:$0xf]
    %v29 = vld [vmem:[%s1 + $0xc] sm:$0xf]
    %v30 = vld [vmem:[%s1 + $0x10] sm:$0xf]
    %v31 = vld [vmem:[%s1 + $0x14] sm:$0xf]
    %v32 = vld [vmem:[%s1 + $0x18] sm:$0xf]
    %v33 = vld [vmem:[%s1 + $0x1c] sm:$0xf]
    %v34 = vld [vmem:[%s1 + $0x20] sm:$0xf]
    %v35 = vld [vmem:[%s1 + $0x24] sm:$0xf]
    %v36 = vld [vmem:[%s1 + $0x28] sm:$0xf]
    %v37 = vld [vmem:[%s1 + $0x2c] sm:$0xf]
    %v38 = vld [vmem:[%s1 + $0x30] sm:$0xf]
    %v39 = vld [vmem:[%s1 + $0x34] sm:$0xf]
    %v40 = vld [vmem:[%s1 + $0x38] sm:$0xf]
    %v41 = vld [vmem:[%s1 + $0x3c] sm:$0xf]
    %v42 = vld [vmem:[%s2] sm:$0xf]
    %v43 = vld [vmem:[%s2 + $0x4] sm:$0xf]
    %v44 = vld [vmem:[%s2 + $0x8] sm:$0xf]
    %v45 = vld [vmem:[%s2 + $0xc] sm:$0xf]
    %v50 = vunpack.c.l.b16 %v42
    %v51 = vunpack.c.l.b16 %v43
    %v52 = vunpack.c.l.b16 %v44
    %v53 = vunpack.c.l.b16 %v45
    %v54 = vpack.c.b16 %v51, %v50
    %v55 = vpack.c.b16 %v53, %v52
    %vm58 = vcmask 261120
    %v60 = vsel %vm58, 0, 0
    %62 = vmatprep.subr.bf16.mxu0 0
    %63 = vmatpush1.bf16.msra.mxu0 %v54
    %64 = vmatprep.subr.bf16.mxu0 0
    %65 = vmatpush1.bf16.msra.mxu0 %v55
    %66 = vmatprep.subr.bf16.mxu0 0
    %67 = vmatpush1.bf16.msra.mxu0 0
    %68 = vmatprep.subr.bf16.mxu0 0
    %69 = vmatpush1.bf16.msra.mxu0 0
    %70 = vmatprep.subr.bf16.mxu0 0
    %71 = vmatpush1.bf16.msra.mxu0 0
    %72 = vmatprep.subr.bf16.mxu0 0
    %73 = vmatpush1.bf16.msra.mxu0 0
    %74 = vmatprep.subr.bf16.mxu0 0
    %75 = vmatpush1.bf16.msra.mxu0 0
    %76 = vmatprep.subr.bf16.mxu0 0
    %77 = vmatpush1.bf16.msra.mxu0 0
    %78 = vmatprep.subr.bf16.mxu0 0
    %79 = vmatpush1.bf16.msra.mxu0 0
    %80 = vmatprep.subr.bf16.mxu0 0
    %81 = vmatpush1.bf16.msra.mxu0 0
    %82 = vmatprep.subr.bf16.mxu0 0
    %83 = vmatpush1.bf16.msra.mxu0 0
    %84 = vmatprep.subr.bf16.mxu0 0
    %85 = vmatpush1.bf16.msra.mxu0 0
    %86 = vmatprep.subr.bf16.mxu0 0
    %87 = vmatpush1.bf16.msra.mxu0 0
    %88 = vmatprep.subr.bf16.mxu0 0
    %89 = vmatpush1.bf16.msra.mxu0 0
    %90 = vmatprep.subr.bf16.mxu0 0
    %91 = vmatpush1.bf16.msra.mxu0 0
    %92 = vmatprep.subr.bf16.mxu0 0
    %93 = vmatpush1.bf16.msra.mxu0 0
    %94 = vmatprep.mubr.bf16.mxu0 0
    %95 = vmatmul.mubr.bf16.gmra.mrb[0].mxu0 %v60
    %v96 = vpop.f32.mrb[0].mxu0
    %v97 = vadd.f32 0.0, %v96
    %v98 = vpop.f32.mrb[0].mxu0
    %v99 = vpop.f32.mrb[0].mxu0
    %v100 = vpop.f32.mrb[0].mxu0
    %101 = vdwg.mxu0
    %v118 = vunpack.c.l.b16 %v26
    %v119 = vunpack.c.l.b16 %v27
    %v120 = vunpack.c.l.b16 %v28
    %v121 = vunpack.c.l.b16 %v29
    %v122 = vunpack.c.l.b16 %v30
    %v123 = vunpack.c.l.b16 %v31
    %v124 = vunpack.c.l.b16 %v32
    %v125 = vunpack.c.l.b16 %v33
    %v126 = vunpack.c.l.b16 %v34
    %v127 = vunpack.c.l.b16 %v35
    %v128 = vunpack.c.l.b16 %v36
    %v129 = vunpack.c.l.b16 %v37
    %v130 = vunpack.c.l.b16 %v38
    %v131 = vunpack.c.l.b16 %v39
    %v132 = vunpack.c.l.b16 %v40
    %v133 = vunpack.c.l.b16 %v41
    %v134 = vpack.c.b16 %v119, %v118
    %v135 = vpack.c.b16 %v121, %v120
    %v136 = vpack.c.b16 %v123, %v122
    %v137 = vpack.c.b16 %v125, %v124
    %v138 = vpack.c.b16 %v127, %v126
    %v139 = vpack.c.b16 %v129, %v128
    %v140 = vpack.c.b16 %v131, %v130
    %v141 = vpack.c.b16 %v133, %v132
    %150 = vmatprep.subr.bf16.mxu0 0
    %151 = vmatpush1.bf16.msra.mxu0 %v134
    %152 = vmatprep.subr.bf16.mxu0 0
    %153 = vmatpush1.bf16.msra.mxu0 %v135
    %154 = vmatprep.subr.bf16.mxu0 0
    %155 = vmatpush1.bf16.msra.mxu0 %v136
    %156 = vmatprep.subr.bf16.mxu0 0
    %157 = vmatpush1.bf16.msra.mxu0 %v137
    %158 = vmatprep.subr.bf16.mxu0 0
    %159 = vmatpush1.bf16.msra.mxu0 %v138
    %160 = vmatprep.subr.bf16.mxu0 0
    %161 = vmatpush1.bf16.msra.mxu0 %v139
    %162 = vmatprep.subr.bf16.mxu0 0
    %163 = vmatpush1.bf16.msra.mxu0 %v140
    %164 = vmatprep.subr.bf16.mxu0 0
    %165 = vmatpush1.bf16.msra.mxu0 %v141
    %166 = vmatprep.subr.bf16.mxu0 0
    %167 = vmatpush1.bf16.msra.mxu0 0
    %168 = vmatprep.subr.bf16.mxu0 0
    %169 = vmatpush1.bf16.msra.mxu0 0
    %170 = vmatprep.subr.bf16.mxu0 0
    %171 = vmatpush1.bf16.msra.mxu0 0
    %172 = vmatprep.subr.bf16.mxu0 0
    %173 = vmatpush1.bf16.msra.mxu0 0
    %174 = vmatprep.subr.bf16.mxu0 0
    %175 = vmatpush1.bf16.msra.mxu0 0
    %176 = vmatprep.subr.bf16.mxu0 0
    %177 = vmatpush1.bf16.msra.mxu0 0
    %178 = vmatprep.subr.bf16.mxu0 0
    %179 = vmatpush1.bf16.msra.mxu0 0
    %180 = vmatprep.subr.bf16.mxu0 0
    %181 = vmatpush1.bf16.msra.mxu0 0
    %182 = vmatprep.mubr.bf16.mxu0 0
    %183 = vmatmul.mubr.bf16.gmra.mrb[0].mxu0 %v25
    %v184 = vpop.f32.mrb[0].mxu0
    %v185 = vadd.f32 %v97, %v184
    %v186 = vpop.f32.mrb[0].mxu0
    %v187 = vpop.f32.mrb[0].mxu0
    %v188 = vpop.f32.mrb[0].mxu0
    %189 = vdwg.mxu0
    %v190 = vld [vmem:[%s3] sm:$0x1]
    %v192 = vlaneseq
    %v193 = vshrl.u32 %v192, 7
    %v194 = vsub.s32 0, %v193
    %v195 = vrot.slane %v190, %v194
    %v197 = vadd.f32 %v185, %v195
    %v198 = vxor.u32 %v197, 2147483648
    %v199 = vmul.f32 %v198, 1.442695
    %v200 = vpow.pop %v199
    %v201 = vadd.f32 %v200, 1.0
    %v202 = vrcp.pop %v201
    %v203 = vmul.f32 1.0, %v202
    %v204 = vtanh.pop %v197
    %v205 = vmul.f32 %v203, 0.0
    %207 = vrot.lane.b32.xlu0 %v204, 32
    %v208 = vpop.permute.xlu0 %207
    %v210 = vmul.f32 %v203, %v208
    %212 = vrot.lane.b32.xlu0 %v210, 32
    %v213 = vpop.permute.xlu0 %212
    %v215 = vadd.f32 %v205, %v213
    %v216 = vtanh.pop %v215
    %218 = vrot.lane.b32.xlu0 %v216, 32
    %v219 = vpop.permute.xlu0 %218
    %v221 = vmul.f32 %v203, %v219
    %s222 = scalar_lea.vmem %s0, 1
    %v223 = vld [vmem:[%s222] sm:$0x1]
    %v224 = vpack.c.bf16 %v221, %v221
    %226 = vrot.lane.b32.xlu0 %v224, 64
    %v227 = vpop.permute.xlu0 %226
    %v229 = vsel %vm58, %v227, 0
    %231 = vmatprep.subr.bf16.mxu0 0
    %232 = vmatpush1.bf16.msra.mxu0 %v54
    %233 = vmatprep.subr.bf16.mxu0 0
    %234 = vmatpush1.bf16.msra.mxu0 %v55
    %235 = vmatprep.subr.bf16.mxu0 0
    %236 = vmatpush1.bf16.msra.mxu0 0
    %237 = vmatprep.subr.bf16.mxu0 0
    %238 = vmatpush1.bf16.msra.mxu0 0
    %239 = vmatprep.subr.bf16.mxu0 0
    %240 = vmatpush1.bf16.msra.mxu0 0
    %241 = vmatprep.subr.bf16.mxu0 0
    %242 = vmatpush1.bf16.msra.mxu0 0
    %243 = vmatprep.subr.bf16.mxu0 0
    %244 = vmatpush1.bf16.msra.mxu0 0
    %245 = vmatprep.subr.bf16.mxu0 0
    %246 = vmatpush1.bf16.msra.mxu0 0
    %247 = vmatprep.subr.bf16.mxu0 0
    %248 = vmatpush1.bf16.msra.mxu0 0
    %249 = vmatprep.subr.bf16.mxu0 0
    %250 = vmatpush1.bf16.msra.mxu0 0
    %251 = vmatprep.subr.bf16.mxu0 0
    %252 = vmatpush1.bf16.msra.mxu0 0
    %253 = vmatprep.subr.bf16.mxu0 0
    %254 = vmatpush1.bf16.msra.mxu0 0
    %255 = vmatprep.subr.bf16.mxu0 0
    %256 = vmatpush1.bf16.msra.mxu0 0
    %257 = vmatprep.subr.bf16.mxu0 0
    %258 = vmatpush1.bf16.msra.mxu0 0
    %259 = vmatprep.subr.bf16.mxu0 0
    %260 = vmatpush1.bf16.msra.mxu0 0
    %261 = vmatprep.subr.bf16.mxu0 0
    %262 = vmatpush1.bf16.msra.mxu0 0
    %263 = vmatprep.mubr.bf16.mxu0 0
    %264 = vmatmul.mubr.bf16.gmra.mrb[0].mxu0 %v229
    %v265 = vpop.f32.mrb[0].mxu0
    %v266 = vadd.f32 0.0, %v265
    %v267 = vpop.f32.mrb[0].mxu0
    %v268 = vpop.f32.mrb[0].mxu0
    %v269 = vpop.f32.mrb[0].mxu0
    %270 = vdwg.mxu0
    %271 = vmatprep.subr.bf16.mxu0 0
    %272 = vmatpush1.bf16.msra.mxu0 %v134
    %273 = vmatprep.subr.bf16.mxu0 0
    %274 = vmatpush1.bf16.msra.mxu0 %v135
    %275 = vmatprep.subr.bf16.mxu0 0
    %276 = vmatpush1.bf16.msra.mxu0 %v136
    %277 = vmatprep.subr.bf16.mxu0 0
    %278 = vmatpush1.bf16.msra.mxu0 %v137
    %279 = vmatprep.subr.bf16.mxu0 0
    %280 = vmatpush1.bf16.msra.mxu0 %v138
    %281 = vmatprep.subr.bf16.mxu0 0
    %282 = vmatpush1.bf16.msra.mxu0 %v139
    %283 = vmatprep.subr.bf16.mxu0 0
    %284 = vmatpush1.bf16.msra.mxu0 %v140
    %285 = vmatprep.subr.bf16.mxu0 0
    %286 = vmatpush1.bf16.msra.mxu0 %v141
    %287 = vmatprep.subr.bf16.mxu0 0
    %288 = vmatpush1.bf16.msra.mxu0 0
    %289 = vmatprep.subr.bf16.mxu0 0
    %290 = vmatpush1.bf16.msra.mxu0 0
    %291 = vmatprep.subr.bf16.mxu0 0
    %292 = vmatpush1.bf16.msra.mxu0 0
    %293 = vmatprep.subr.bf16.mxu0 0
    %294 = vmatpush1.bf16.msra.mxu0 0
    %295 = vmatprep.subr.bf16.mxu0 0
    %296 = vmatpush1.bf16.msra.mxu0 0
    %297 = vmatprep.subr.bf16.mxu0 0
    %298 = vmatpush1.bf16.msra.mxu0 0
    %299 = vmatprep.subr.bf16.mxu0 0
    %300 = vmatpush1.bf16.msra.mxu0 0
    %301 = vmatprep.subr.bf16.mxu0 0
    %302 = vmatpush1.bf16.msra.mxu0 0
    %303 = vmatprep.mubr.bf16.mxu0 0
    %304 = vmatmul.mubr.bf16.gmra.mrb[0].mxu0 %v223
    %v305 = vpop.f32.mrb[0].mxu0
    %v306 = vadd.f32 %v266, %v305
    %v307 = vpop.f32.mrb[0].mxu0
    %v308 = vpop.f32.mrb[0].mxu0
    %v309 = vpop.f32.mrb[0].mxu0
    %310 = vdwg.mxu0
    %v311 = vadd.f32 %v306, %v195
    %v312 = vxor.u32 %v311, 2147483648
    %v313 = vmul.f32 %v312, 1.442695
    %v314 = vpow.pop %v313
    %v315 = vadd.f32 %v314, 1.0
    %v316 = vrcp.pop %v315
    %v317 = vmul.f32 1.0, %v316
    %v318 = vtanh.pop %v311
    %v319 = vmul.f32 %v317, %v215
    %321 = vrot.lane.b32.xlu0 %v318, 32
    %v322 = vpop.permute.xlu0 %321
    %v324 = vmul.f32 %v317, %v322
    %326 = vrot.lane.b32.xlu0 %v324, 32
    %v327 = vpop.permute.xlu0 %326
    %v329 = vadd.f32 %v319, %v327
    %v330 = vtanh.pop %v329
    %332 = vrot.lane.b32.xlu0 %v330, 32
    %v333 = vpop.permute.xlu0 %332
    %v335 = vmul.f32 %v317, %v333
    %s336 = scalar_lea.vmem %s0, 2
    %v337 = vld [vmem:[%s336] sm:$0x1]
    %v338 = vpack.c.bf16 %v335, %v335
    %340 = vrot.lane.b32.xlu0 %v338, 64
    %v341 = vpop.permute.xlu0 %340
    %v343 = vsel %vm58, %v341, 0
    %345 = vmatprep.subr.bf16.mxu0 0
    %346 = vmatpush1.bf16.msra.mxu0 %v54
    %347 = vmatprep.subr.bf16.mxu0 0
    %348 = vmatpush1.bf16.msra.mxu0 %v55
    %349 = vmatprep.subr.bf16.mxu0 0
    %350 = vmatpush1.bf16.msra.mxu0 0
    %351 = vmatprep.subr.bf16.mxu0 0
    %352 = vmatpush1.bf16.msra.mxu0 0
    %353 = vmatprep.subr.bf16.mxu0 0
    %354 = vmatpush1.bf16.msra.mxu0 0
    %355 = vmatprep.subr.bf16.mxu0 0
    %356 = vmatpush1.bf16.msra.mxu0 0
    %357 = vmatprep.subr.bf16.mxu0 0
    %358 = vmatpush1.bf16.msra.mxu0 0
    %359 = vmatprep.subr.bf16.mxu0 0
    %360 = vmatpush1.bf16.msra.mxu0 0
    %361 = vmatprep.subr.bf16.mxu0 0
    %362 = vmatpush1.bf16.msra.mxu0 0
    %363 = vmatprep.subr.bf16.mxu0 0
    %364 = vmatpush1.bf16.msra.mxu0 0
    %365 = vmatprep.subr.bf16.mxu0 0
    %366 = vmatpush1.bf16.msra.mxu0 0
    %367 = vmatprep.subr.bf16.mxu0 0
    %368 = vmatpush1.bf16.msra.mxu0 0
    %369 = vmatprep.subr.bf16.mxu0 0
    %370 = vmatpush1.bf16.msra.mxu0 0
    %371 = vmatprep.subr.bf16.mxu0 0
    %372 = vmatpush1.bf16.msra.mxu0 0
    %373 = vmatprep.subr.bf16.mxu0 0
    %374 = vmatpush1.bf16.msra.mxu0 0
    %375 = vmatprep.subr.bf16.mxu0 0
    %376 = vmatpush1.bf16.msra.mxu0 0
    %377 = vmatprep.mubr.bf16.mxu0 0
    %378 = vmatmul.mubr.bf16.gmra.mrb[0].mxu0 %v343
    %v379 = vpop.f32.mrb[0].mxu0
    %v380 = vadd.f32 0.0, %v379
    %v381 = vpop.f32.mrb[0].mxu0
    %v382 = vpop.f32.mrb[0].mxu0
    %v383 = vpop.f32.mrb[0].mxu0
    %384 = vdwg.mxu0
    %385 = vmatprep.subr.bf16.mxu0 0
    %386 = vmatpush1.bf16.msra.mxu0 %v134
    %387 = vmatprep.subr.bf16.mxu0 0
    %388 = vmatpush1.bf16.msra.mxu0 %v135
    %389 = vmatprep.subr.bf16.mxu0 0
    %390 = vmatpush1.bf16.msra.mxu0 %v136
    %391 = vmatprep.subr.bf16.mxu0 0
    %392 = vmatpush1.bf16.msra.mxu0 %v137
    %393 = vmatprep.subr.bf16.mxu0 0
    %394 = vmatpush1.bf16.msra.mxu0 %v138
    %395 = vmatprep.subr.bf16.mxu0 0
    %396 = vmatpush1.bf16.msra.mxu0 %v139
    %397 = vmatprep.subr.bf16.mxu0 0
    %398 = vmatpush1.bf16.msra.mxu0 %v140
    %399 = vmatprep.subr.bf16.mxu0 0
    %400 = vmatpush1.bf16.msra.mxu0 %v141
    %401 = vmatprep.subr.bf16.mxu0 0
    %402 = vmatpush1.bf16.msra.mxu0 0
    %403 = vmatprep.subr.bf16.mxu0 0
    %404 = vmatpush1.bf16.msra.mxu0 0
    %405 = vmatprep.subr.bf16.mxu0 0
    %406 = vmatpush1.bf16.msra.mxu0 0
    %407 = vmatprep.subr.bf16.mxu0 0
    %408 = vmatpush1.bf16.msra.mxu0 0
    %409 = vmatprep.subr.bf16.mxu0 0
    %410 = vmatpush1.bf16.msra.mxu0 0
    %411 = vmatprep.subr.bf16.mxu0 0
    %412 = vmatpush1.bf16.msra.mxu0 0
    %413 = vmatprep.subr.bf16.mxu0 0
    %414 = vmatpush1.bf16.msra.mxu0 0
    %415 = vmatprep.subr.bf16.mxu0 0
    %416 = vmatpush1.bf16.msra.mxu0 0
    %417 = vmatprep.mubr.bf16.mxu0 0
    %418 = vmatmul.mubr.bf16.gmra.mrb[0].mxu0 %v337
    %v419 = vpop.f32.mrb[0].mxu0
    %v420 = vadd.f32 %v380, %v419
    %v421 = vpop.f32.mrb[0].mxu0
    %v422 = vpop.f32.mrb[0].mxu0
    %v423 = vpop.f32.mrb[0].mxu0
    %424 = vdwg.mxu0
    %v425 = vadd.f32 %v420, %v195
    %v426 = vxor.u32 %v425, 2147483648
    %v427 = vmul.f32 %v426, 1.442695
    %v428 = vpow.pop %v427
    %v429 = vadd.f32 %v428, 1.0
    %v430 = vrcp.pop %v429
    %v431 = vmul.f32 1.0, %v430
    %v432 = vtanh.pop %v425
    %v433 = vmul.f32 %v431, %v329
    %435 = vrot.lane.b32.xlu0 %v432, 32
    %v436 = vpop.permute.xlu0 %435
    %v438 = vmul.f32 %v431, %v436
    %440 = vrot.lane.b32.xlu0 %v438, 32
    %v441 = vpop.permute.xlu0 %440
    %v443 = vadd.f32 %v433, %v441
    %v444 = vtanh.pop %v443
    %446 = vrot.lane.b32.xlu0 %v444, 32
    %v447 = vpop.permute.xlu0 %446
    %v449 = vmul.f32 %v431, %v447
    %s450 = scalar_lea.vmem %s0, 3
    %v451 = vld [vmem:[%s450] sm:$0x1]
    %v452 = vpack.c.bf16 %v449, %v449
    %454 = vrot.lane.b32.xlu0 %v452, 64
    %v455 = vpop.permute.xlu0 %454
    %v457 = vsel %vm58, %v455, 0
    %459 = vmatprep.subr.bf16.mxu0 0
    %460 = vmatpush1.bf16.msra.mxu0 %v54
    %461 = vmatprep.subr.bf16.mxu0 0
    %462 = vmatpush1.bf16.msra.mxu0 %v55
    %463 = vmatprep.subr.bf16.mxu0 0
    %464 = vmatpush1.bf16.msra.mxu0 0
    %465 = vmatprep.subr.bf16.mxu0 0
    %466 = vmatpush1.bf16.msra.mxu0 0
    %467 = vmatprep.subr.bf16.mxu0 0
    %468 = vmatpush1.bf16.msra.mxu0 0
    %469 = vmatprep.subr.bf16.mxu0 0
    %470 = vmatpush1.bf16.msra.mxu0 0
    %471 = vmatprep.subr.bf16.mxu0 0
    %472 = vmatpush1.bf16.msra.mxu0 0
    %473 = vmatprep.subr.bf16.mxu0 0
    %474 = vmatpush1.bf16.msra.mxu0 0
    %475 = vmatprep.subr.bf16.mxu0 0
    %476 = vmatpush1.bf16.msra.mxu0 0
    %477 = vmatprep.subr.bf16.mxu0 0
    %478 = vmatpush1.bf16.msra.mxu0 0
    %479 = vmatprep.subr.bf16.mxu0 0
    %480 = vmatpush1.bf16.msra.mxu0 0
    %481 = vmatprep.subr.bf16.mxu0 0
    %482 = vmatpush1.bf16.msra.mxu0 0
    %483 = vmatprep.subr.bf16.mxu0 0
    %484 = vmatpush1.bf16.msra.mxu0 0
    %485 = vmatprep.subr.bf16.mxu0 0
    %486 = vmatpush1.bf16.msra.mxu0 0
    %487 = vmatprep.subr.bf16.mxu0 0
    %488 = vmatpush1.bf16.msra.mxu0 0
    %489 = vmatprep.subr.bf16.mxu0 0
    %490 = vmatpush1.bf16.msra.mxu0 0
    %491 = vmatprep.mubr.bf16.mxu0 0
    %492 = vmatmul.mubr.bf16.gmra.mrb[0].mxu0 %v457
    %v493 = vpop.f32.mrb[0].mxu0
    %v494 = vadd.f32 0.0, %v493
    %v495 = vpop.f32.mrb[0].mxu0
    %v496 = vpop.f32.mrb[0].mxu0
    %v497 = vpop.f32.mrb[0].mxu0
    %498 = vdwg.mxu0
    %499 = vmatprep.subr.bf16.mxu0 0
    %500 = vmatpush1.bf16.msra.mxu0 %v134
    %501 = vmatprep.subr.bf16.mxu0 0
    %502 = vmatpush1.bf16.msra.mxu0 %v135
    %503 = vmatprep.subr.bf16.mxu0 0
    %504 = vmatpush1.bf16.msra.mxu0 %v136
    %505 = vmatprep.subr.bf16.mxu0 0
    %506 = vmatpush1.bf16.msra.mxu0 %v137
    %507 = vmatprep.subr.bf16.mxu0 0
    %508 = vmatpush1.bf16.msra.mxu0 %v138
    %509 = vmatprep.subr.bf16.mxu0 0
    %510 = vmatpush1.bf16.msra.mxu0 %v139
    %511 = vmatprep.subr.bf16.mxu0 0
    %512 = vmatpush1.bf16.msra.mxu0 %v140
    %513 = vmatprep.subr.bf16.mxu0 0
    %514 = vmatpush1.bf16.msra.mxu0 %v141
    %515 = vmatprep.subr.bf16.mxu0 0
    %516 = vmatpush1.bf16.msra.mxu0 0
    %517 = vmatprep.subr.bf16.mxu0 0
    %518 = vmatpush1.bf16.msra.mxu0 0
    %519 = vmatprep.subr.bf16.mxu0 0
    %520 = vmatpush1.bf16.msra.mxu0 0
    %521 = vmatprep.subr.bf16.mxu0 0
    %522 = vmatpush1.bf16.msra.mxu0 0
    %523 = vmatprep.subr.bf16.mxu0 0
    %524 = vmatpush1.bf16.msra.mxu0 0
    %525 = vmatprep.subr.bf16.mxu0 0
    %526 = vmatpush1.bf16.msra.mxu0 0
    %527 = vmatprep.subr.bf16.mxu0 0
    %528 = vmatpush1.bf16.msra.mxu0 0
    %529 = vmatprep.subr.bf16.mxu0 0
    %530 = vmatpush1.bf16.msra.mxu0 0
    %531 = vmatprep.mubr.bf16.mxu0 0
    %532 = vmatmul.mubr.bf16.gmra.mrb[0].mxu0 %v451
    %v533 = vpop.f32.mrb[0].mxu0
    %v534 = vadd.f32 %v494, %v533
    %v535 = vpop.f32.mrb[0].mxu0
    %v536 = vpop.f32.mrb[0].mxu0
    %v537 = vpop.f32.mrb[0].mxu0
    %538 = vdwg.mxu0
    %v539 = vadd.f32 %v534, %v195
    %v540 = vxor.u32 %v539, 2147483648
    %v541 = vmul.f32 %v540, 1.442695
    %v542 = vpow.pop %v541
    %v543 = vadd.f32 %v542, 1.0
    %v544 = vrcp.pop %v543
    %v545 = vmul.f32 1.0, %v544
    %v546 = vtanh.pop %v539
    %v547 = vmul.f32 %v545, %v443
    %549 = vrot.lane.b32.xlu0 %v546, 32
    %v550 = vpop.permute.xlu0 %549
    %v552 = vmul.f32 %v545, %v550
    %554 = vrot.lane.b32.xlu0 %v552, 32
    %v555 = vpop.permute.xlu0 %554
    %v557 = vadd.f32 %v547, %v555
    %v558 = vtanh.pop %v557
    %560 = vrot.lane.b32.xlu0 %v558, 32
    %v561 = vpop.permute.xlu0 %560
    %v563 = vmul.f32 %v545, %v561
    %s564 = scalar_lea.vmem %s0, 4
    %v565 = vld [vmem:[%s564] sm:$0x1]
    %v566 = vpack.c.bf16 %v563, %v563
    %568 = vrot.lane.b32.xlu0 %v566, 64
    %v569 = vpop.permute.xlu0 %568
    %v571 = vsel %vm58, %v569, 0
    %573 = vmatprep.subr.bf16.mxu0 0
    %574 = vmatpush1.bf16.msra.mxu0 %v54
    %575 = vmatprep.subr.bf16.mxu0 0
    %576 = vmatpush1.bf16.msra.mxu0 %v55
    %577 = vmatprep.subr.bf16.mxu0 0
    %578 = vmatpush1.bf16.msra.mxu0 0
    %579 = vmatprep.subr.bf16.mxu0 0
    %580 = vmatpush1.bf16.msra.mxu0 0
    %581 = vmatprep.subr.bf16.mxu0 0
    %582 = vmatpush1.bf16.msra.mxu0 0
    %583 = vmatprep.subr.bf16.mxu0 0
    %584 = vmatpush1.bf16.msra.mxu0 0
    %585 = vmatprep.subr.bf16.mxu0 0
    %586 = vmatpush1.bf16.msra.mxu0 0
    %587 = vmatprep.subr.bf16.mxu0 0
    %588 = vmatpush1.bf16.msra.mxu0 0
    %589 = vmatprep.subr.bf16.mxu0 0
    %590 = vmatpush1.bf16.msra.mxu0 0
    %591 = vmatprep.subr.bf16.mxu0 0
    %592 = vmatpush1.bf16.msra.mxu0 0
    %593 = vmatprep.subr.bf16.mxu0 0
    %594 = vmatpush1.bf16.msra.mxu0 0
    %595 = vmatprep.subr.bf16.mxu0 0
    %596 = vmatpush1.bf16.msra.mxu0 0
    %597 = vmatprep.subr.bf16.mxu0 0
    %598 = vmatpush1.bf16.msra.mxu0 0
    %599 = vmatprep.subr.bf16.mxu0 0
    %600 = vmatpush1.bf16.msra.mxu0 0
    %601 = vmatprep.subr.bf16.mxu0 0
    %602 = vmatpush1.bf16.msra.mxu0 0
    %603 = vmatprep.subr.bf16.mxu0 0
    %604 = vmatpush1.bf16.msra.mxu0 0
    %605 = vmatprep.mubr.bf16.mxu0 0
    %606 = vmatmul.mubr.bf16.gmra.mrb[0].mxu0 %v571
    %v607 = vpop.f32.mrb[0].mxu0
    %v608 = vadd.f32 0.0, %v607
    %v609 = vpop.f32.mrb[0].mxu0
    %v610 = vpop.f32.mrb[0].mxu0
    %v611 = vpop.f32.mrb[0].mxu0
    %612 = vdwg.mxu0
    %613 = vmatprep.subr.bf16.mxu0 0
    %614 = vmatpush1.bf16.msra.mxu0 %v134
    %615 = vmatprep.subr.bf16.mxu0 0
    %616 = vmatpush1.bf16.msra.mxu0 %v135
    %617 = vmatprep.subr.bf16.mxu0 0
    %618 = vmatpush1.bf16.msra.mxu0 %v136
    %619 = vmatprep.subr.bf16.mxu0 0
    %620 = vmatpush1.bf16.msra.mxu0 %v137
    %621 = vmatprep.subr.bf16.mxu0 0
    %622 = vmatpush1.bf16.msra.mxu0 %v138
    %623 = vmatprep.subr.bf16.mxu0 0
    %624 = vmatpush1.bf16.msra.mxu0 %v139
    %625 = vmatprep.subr.bf16.mxu0 0
    %626 = vmatpush1.bf16.msra.mxu0 %v140
    %627 = vmatprep.subr.bf16.mxu0 0
    %628 = vmatpush1.bf16.msra.mxu0 %v141
    %629 = vmatprep.subr.bf16.mxu0 0
    %630 = vmatpush1.bf16.msra.mxu0 0
    %631 = vmatprep.subr.bf16.mxu0 0
    %632 = vmatpush1.bf16.msra.mxu0 0
    %633 = vmatprep.subr.bf16.mxu0 0
    %634 = vmatpush1.bf16.msra.mxu0 0
    %635 = vmatprep.subr.bf16.mxu0 0
    %636 = vmatpush1.bf16.msra.mxu0 0
    %637 = vmatprep.subr.bf16.mxu0 0
    %638 = vmatpush1.bf16.msra.mxu0 0
    %639 = vmatprep.subr.bf16.mxu0 0
    %640 = vmatpush1.bf16.msra.mxu0 0
    %641 = vmatprep.subr.bf16.mxu0 0
    %642 = vmatpush1.bf16.msra.mxu0 0
    %643 = vmatprep.subr.bf16.mxu0 0
    %644 = vmatpush1.bf16.msra.mxu0 0
    %645 = vmatprep.mubr.bf16.mxu0 0
    %646 = vmatmul.mubr.bf16.gmra.mrb[0].mxu0 %v565
    %v647 = vpop.f32.mrb[0].mxu0
    %v648 = vadd.f32 %v608, %v647
    %v649 = vpop.f32.mrb[0].mxu0
    %v650 = vpop.f32.mrb[0].mxu0
    %v651 = vpop.f32.mrb[0].mxu0
    %652 = vdwg.mxu0
    %v653 = vadd.f32 %v648, %v195
    %v654 = vxor.u32 %v653, 2147483648
    %v655 = vmul.f32 %v654, 1.442695
    %v656 = vpow.pop %v655
    %v657 = vadd.f32 %v656, 1.0
    %v658 = vrcp.pop %v657
    %v659 = vmul.f32 1.0, %v658
    %v660 = vtanh.pop %v653
    %v661 = vmul.f32 %v659, %v557
    %663 = vrot.lane.b32.xlu0 %v660, 32
    %v664 = vpop.permute.xlu0 %663
    %v666 = vmul.f32 %v659, %v664
    %668 = vrot.lane.b32.xlu0 %v666, 32
    %v669 = vpop.permute.xlu0 %668
    %v671 = vadd.f32 %v661, %v669
    %v672 = vtanh.pop %v671
    %674 = vrot.lane.b32.xlu0 %v672, 32
    %v675 = vpop.permute.xlu0 %674
    %v677 = vmul.f32 %v659, %v675
    %s678 = scalar_lea.vmem %s0, 5
    %v679 = vld [vmem:[%s678] sm:$0x1]
    %v680 = vpack.c.bf16 %v677, %v677
    %682 = vrot.lane.b32.xlu0 %v680, 64
    %v683 = vpop.permute.xlu0 %682
    %v685 = vsel %vm58, %v683, 0
    %687 = vmatprep.subr.bf16.mxu0 0
    %688 = vmatpush1.bf16.msra.mxu0 %v54
    %689 = vmatprep.subr.bf16.mxu0 0
    %690 = vmatpush1.bf16.msra.mxu0 %v55
    %691 = vmatprep.subr.bf16.mxu0 0
    %692 = vmatpush1.bf16.msra.mxu0 0
    %693 = vmatprep.subr.bf16.mxu0 0
    %694 = vmatpush1.bf16.msra.mxu0 0
    %695 = vmatprep.subr.bf16.mxu0 0
    %696 = vmatpush1.bf16.msra.mxu0 0
    %697 = vmatprep.subr.bf16.mxu0 0
    %698 = vmatpush1.bf16.msra.mxu0 0
    %699 = vmatprep.subr.bf16.mxu0 0
    %700 = vmatpush1.bf16.msra.mxu0 0
    %701 = vmatprep.subr.bf16.mxu0 0
    %702 = vmatpush1.bf16.msra.mxu0 0
    %703 = vmatprep.subr.bf16.mxu0 0
    %704 = vmatpush1.bf16.msra.mxu0 0
    %705 = vmatprep.subr.bf16.mxu0 0
    %706 = vmatpush1.bf16.msra.mxu0 0
    %707 = vmatprep.subr.bf16.mxu0 0
    %708 = vmatpush1.bf16.msra.mxu0 0
    %709 = vmatprep.subr.bf16.mxu0 0
    %710 = vmatpush1.bf16.msra.mxu0 0
    %711 = vmatprep.subr.bf16.mxu0 0
    %712 = vmatpush1.bf16.msra.mxu0 0
    %713 = vmatprep.subr.bf16.mxu0 0
    %714 = vmatpush1.bf16.msra.mxu0 0
    %715 = vmatprep.subr.bf16.mxu0 0
    %716 = vmatpush1.bf16.msra.mxu0 0
    %717 = vmatprep.subr.bf16.mxu0 0
    %718 = vmatpush1.bf16.msra.mxu0 0
    %719 = vmatprep.mubr.bf16.mxu0 0
    %720 = vmatmul.mubr.bf16.gmra.mrb[0].mxu0 %v685
    %v721 = vpop.f32.mrb[0].mxu0
    %v722 = vadd.f32 0.0, %v721
    %v723 = vpop.f32.mrb[0].mxu0
    %v724 = vpop.f32.mrb[0].mxu0
    %v725 = vpop.f32.mrb[0].mxu0
    %726 = vdwg.mxu0
    %727 = vmatprep.subr.bf16.mxu0 0
    %728 = vmatpush1.bf16.msra.mxu0 %v134
    %729 = vmatprep.subr.bf16.mxu0 0
    %730 = vmatpush1.bf16.msra.mxu0 %v135
    %731 = vmatprep.subr.bf16.mxu0 0
    %732 = vmatpush1.bf16.msra.mxu0 %v136
    %733 = vmatprep.subr.bf16.mxu0 0
    %734 = vmatpush1.bf16.msra.mxu0 %v137
    %735 = vmatprep.subr.bf16.mxu0 0
    %736 = vmatpush1.bf16.msra.mxu0 %v138
    %737 = vmatprep.subr.bf16.mxu0 0
    %738 = vmatpush1.bf16.msra.mxu0 %v139
    %739 = vmatprep.subr.bf16.mxu0 0
    %740 = vmatpush1.bf16.msra.mxu0 %v140
    %741 = vmatprep.subr.bf16.mxu0 0
    %742 = vmatpush1.bf16.msra.mxu0 %v141
    %743 = vmatprep.subr.bf16.mxu0 0
    %744 = vmatpush1.bf16.msra.mxu0 0
    %745 = vmatprep.subr.bf16.mxu0 0
    %746 = vmatpush1.bf16.msra.mxu0 0
    %747 = vmatprep.subr.bf16.mxu0 0
    %748 = vmatpush1.bf16.msra.mxu0 0
    %749 = vmatprep.subr.bf16.mxu0 0
    %750 = vmatpush1.bf16.msra.mxu0 0
    %751 = vmatprep.subr.bf16.mxu0 0
    %752 = vmatpush1.bf16.msra.mxu0 0
    %753 = vmatprep.subr.bf16.mxu0 0
    %754 = vmatpush1.bf16.msra.mxu0 0
    %755 = vmatprep.subr.bf16.mxu0 0
    %756 = vmatpush1.bf16.msra.mxu0 0
    %757 = vmatprep.subr.bf16.mxu0 0
    %758 = vmatpush1.bf16.msra.mxu0 0
    %759 = vmatprep.mubr.bf16.mxu0 0
    %760 = vmatmul.mubr.bf16.gmra.mrb[0].mxu0 %v679
    %v761 = vpop.f32.mrb[0].mxu0
    %v762 = vadd.f32 %v722, %v761
    %v763 = vpop.f32.mrb[0].mxu0
    %v764 = vpop.f32.mrb[0].mxu0
    %v765 = vpop.f32.mrb[0].mxu0
    %766 = vdwg.mxu0
    %v767 = vadd.f32 %v762, %v195
    %v768 = vxor.u32 %v767, 2147483648
    %v769 = vmul.f32 %v768, 1.442695
    %v770 = vpow.pop %v769
    %v771 = vadd.f32 %v770, 1.0
    %v772 = vrcp.pop %v771
    %v773 = vmul.f32 1.0, %v772
    %v774 = vtanh.pop %v767
    %v775 = vmul.f32 %v773, %v671
    %777 = vrot.lane.b32.xlu0 %v774, 32
    %v778 = vpop.permute.xlu0 %777
    %v780 = vmul.f32 %v773, %v778
    %782 = vrot.lane.b32.xlu0 %v780, 32
    %v783 = vpop.permute.xlu0 %782
    %v785 = vadd.f32 %v775, %v783
    %v786 = vtanh.pop %v785
    %788 = vrot.lane.b32.xlu0 %v786, 32
    %v789 = vpop.permute.xlu0 %788
    %v791 = vmul.f32 %v773, %v789
    %s792 = scalar_lea.vmem %s0, 6
    %v793 = vld [vmem:[%s792] sm:$0x1]
    %v794 = vpack.c.bf16 %v791, %v791
    %796 = vrot.lane.b32.xlu0 %v794, 64
    %v797 = vpop.permute.xlu0 %796
    %v799 = vsel %vm58, %v797, 0
    %801 = vmatprep.subr.bf16.mxu0 0
    %802 = vmatpush1.bf16.msra.mxu0 %v54
    %803 = vmatprep.subr.bf16.mxu0 0
    %804 = vmatpush1.bf16.msra.mxu0 %v55
    %805 = vmatprep.subr.bf16.mxu0 0
    %806 = vmatpush1.bf16.msra.mxu0 0
    %807 = vmatprep.subr.bf16.mxu0 0
    %808 = vmatpush1.bf16.msra.mxu0 0
    %809 = vmatprep.subr.bf16.mxu0 0
    %810 = vmatpush1.bf16.msra.mxu0 0
    %811 = vmatprep.subr.bf16.mxu0 0
    %812 = vmatpush1.bf16.msra.mxu0 0
    %813 = vmatprep.subr.bf16.mxu0 0
    %814 = vmatpush1.bf16.msra.mxu0 0
    %815 = vmatprep.subr.bf16.mxu0 0
    %816 = vmatpush1.bf16.msra.mxu0 0
    %817 = vmatprep.subr.bf16.mxu0 0
    %818 = vmatpush1.bf16.msra.mxu0 0
    %819 = vmatprep.subr.bf16.mxu0 0
    %820 = vmatpush1.bf16.msra.mxu0 0
    %821 = vmatprep.subr.bf16.mxu0 0
    %822 = vmatpush1.bf16.msra.mxu0 0
    %823 = vmatprep.subr.bf16.mxu0 0
    %824 = vmatpush1.bf16.msra.mxu0 0
    %825 = vmatprep.subr.bf16.mxu0 0
    %826 = vmatpush1.bf16.msra.mxu0 0
    %827 = vmatprep.subr.bf16.mxu0 0
    %828 = vmatpush1.bf16.msra.mxu0 0
    %829 = vmatprep.subr.bf16.mxu0 0
    %830 = vmatpush1.bf16.msra.mxu0 0
    %831 = vmatprep.subr.bf16.mxu0 0
    %832 = vmatpush1.bf16.msra.mxu0 0
    %833 = vmatprep.mubr.bf16.mxu0 0
    %834 = vmatmul.mubr.bf16.gmra.mrb[0].mxu0 %v799
    %v835 = vpop.f32.mrb[0].mxu0
    %v836 = vadd.f32 0.0, %v835
    %v837 = vpop.f32.mrb[0].mxu0
    %v838 = vpop.f32.mrb[0].mxu0
    %v839 = vpop.f32.mrb[0].mxu0
    %840 = vdwg.mxu0
    %841 = vmatprep.subr.bf16.mxu0 0
    %842 = vmatpush1.bf16.msra.mxu0 %v134
    %843 = vmatprep.subr.bf16.mxu0 0
    %844 = vmatpush1.bf16.msra.mxu0 %v135
    %845 = vmatprep.subr.bf16.mxu0 0
    %846 = vmatpush1.bf16.msra.mxu0 %v136
    %847 = vmatprep.subr.bf16.mxu0 0
    %848 = vmatpush1.bf16.msra.mxu0 %v137
    %849 = vmatprep.subr.bf16.mxu0 0
    %850 = vmatpush1.bf16.msra.mxu0 %v138
    %851 = vmatprep.subr.bf16.mxu0 0
    %852 = vmatpush1.bf16.msra.mxu0 %v139
    %853 = vmatprep.subr.bf16.mxu0 0
    %854 = vmatpush1.bf16.msra.mxu0 %v140
    %855 = vmatprep.subr.bf16.mxu0 0
    %856 = vmatpush1.bf16.msra.mxu0 %v141
    %857 = vmatprep.subr.bf16.mxu0 0
    %858 = vmatpush1.bf16.msra.mxu0 0
    %859 = vmatprep.subr.bf16.mxu0 0
    %860 = vmatpush1.bf16.msra.mxu0 0
    %861 = vmatprep.subr.bf16.mxu0 0
    %862 = vmatpush1.bf16.msra.mxu0 0
    %863 = vmatprep.subr.bf16.mxu0 0
    %864 = vmatpush1.bf16.msra.mxu0 0
    %865 = vmatprep.subr.bf16.mxu0 0
    %866 = vmatpush1.bf16.msra.mxu0 0
    %867 = vmatprep.subr.bf16.mxu0 0
    %868 = vmatpush1.bf16.msra.mxu0 0
    %869 = vmatprep.subr.bf16.mxu0 0
    %870 = vmatpush1.bf16.msra.mxu0 0
    %871 = vmatprep.subr.bf16.mxu0 0
    %872 = vmatpush1.bf16.msra.mxu0 0
    %873 = vmatprep.mubr.bf16.mxu0 0
    %874 = vmatmul.mubr.bf16.gmra.mrb[0].mxu0 %v793
    %v875 = vpop.f32.mrb[0].mxu0
    %v876 = vadd.f32 %v836, %v875
    %v877 = vpop.f32.mrb[0].mxu0
    %v878 = vpop.f32.mrb[0].mxu0
    %v879 = vpop.f32.mrb[0].mxu0
    %880 = vdwg.mxu0
    %v881 = vadd.f32 %v876, %v195
    %v882 = vxor.u32 %v881, 2147483648
    %v883 = vmul.f32 %v882, 1.442695
    %v884 = vpow.pop %v883
    %v885 = vadd.f32 %v884, 1.0
    %v886 = vrcp.pop %v885
    %v887 = vmul.f32 1.0, %v886
    %v888 = vtanh.pop %v881
    %v889 = vmul.f32 %v887, %v785
    %891 = vrot.lane.b32.xlu0 %v888, 32
    %v892 = vpop.permute.xlu0 %891
    %v894 = vmul.f32 %v887, %v892
    %896 = vrot.lane.b32.xlu0 %v894, 32
    %v897 = vpop.permute.xlu0 %896
    %v899 = vadd.f32 %v889, %v897
    %v900 = vtanh.pop %v899
    %902 = vrot.lane.b32.xlu0 %v900, 32
    %v903 = vpop.permute.xlu0 %902
    %v905 = vmul.f32 %v887, %v903
    %s906 = scalar_lea.vmem %s0, 7
    %v907 = vld [vmem:[%s906] sm:$0x1]
    %v908 = vpack.c.bf16 %v905, %v905
    %910 = vrot.lane.b32.xlu0 %v908, 64
    %v911 = vpop.permute.xlu0 %910
    %v913 = vsel %vm58, %v911, 0
    %915 = vmatprep.subr.bf16.mxu0 0
    %916 = vmatpush1.bf16.msra.mxu0 %v54
    %917 = vmatprep.subr.bf16.mxu0 0
    %918 = vmatpush1.bf16.msra.mxu0 %v55
    %919 = vmatprep.subr.bf16.mxu0 0
    %920 = vmatpush1.bf16.msra.mxu0 0
    %921 = vmatprep.subr.bf16.mxu0 0
    %922 = vmatpush1.bf16.msra.mxu0 0
    %923 = vmatprep.subr.bf16.mxu0 0
    %924 = vmatpush1.bf16.msra.mxu0 0
    %925 = vmatprep.subr.bf16.mxu0 0
    %926 = vmatpush1.bf16.msra.mxu0 0
    %927 = vmatprep.subr.bf16.mxu0 0
    %928 = vmatpush1.bf16.msra.mxu0 0
    %929 = vmatprep.subr.bf16.mxu0 0
    %930 = vmatpush1.bf16.msra.mxu0 0
    %931 = vmatprep.subr.bf16.mxu0 0
    %932 = vmatpush1.bf16.msra.mxu0 0
    %933 = vmatprep.subr.bf16.mxu0 0
    %934 = vmatpush1.bf16.msra.mxu0 0
    %935 = vmatprep.subr.bf16.mxu0 0
    %936 = vmatpush1.bf16.msra.mxu0 0
    %937 = vmatprep.subr.bf16.mxu0 0
    %938 = vmatpush1.bf16.msra.mxu0 0
    %939 = vmatprep.subr.bf16.mxu0 0
    %940 = vmatpush1.bf16.msra.mxu0 0
    %941 = vmatprep.subr.bf16.mxu0 0
    %942 = vmatpush1.bf16.msra.mxu0 0
    %943 = vmatprep.subr.bf16.mxu0 0
    %944 = vmatpush1.bf16.msra.mxu0 0
    %945 = vmatprep.subr.bf16.mxu0 0
    %946 = vmatpush1.bf16.msra.mxu0 0
    %947 = vmatprep.mubr.bf16.mxu0 0
    %948 = vmatmul.mubr.bf16.gmra.mrb[0].mxu0 %v913
    %v949 = vpop.f32.mrb[0].mxu0
    %v950 = vadd.f32 0.0, %v949
    %v951 = vpop.f32.mrb[0].mxu0
    %v952 = vpop.f32.mrb[0].mxu0
    %v953 = vpop.f32.mrb[0].mxu0
    %954 = vdwg.mxu0
    %955 = vmatprep.subr.bf16.mxu0 0
    %956 = vmatpush1.bf16.msra.mxu0 %v134
    %957 = vmatprep.subr.bf16.mxu0 0
    %958 = vmatpush1.bf16.msra.mxu0 %v135
    %959 = vmatprep.subr.bf16.mxu0 0
    %960 = vmatpush1.bf16.msra.mxu0 %v136
    %961 = vmatprep.subr.bf16.mxu0 0
    %962 = vmatpush1.bf16.msra.mxu0 %v137
    %963 = vmatprep.subr.bf16.mxu0 0
    %964 = vmatpush1.bf16.msra.mxu0 %v138
    %965 = vmatprep.subr.bf16.mxu0 0
    %966 = vmatpush1.bf16.msra.mxu0 %v139
    %967 = vmatprep.subr.bf16.mxu0 0
    %968 = vmatpush1.bf16.msra.mxu0 %v140
    %969 = vmatprep.subr.bf16.mxu0 0
    %970 = vmatpush1.bf16.msra.mxu0 %v141
    %971 = vmatprep.subr.bf16.mxu0 0
    %972 = vmatpush1.bf16.msra.mxu0 0
    %973 = vmatprep.subr.bf16.mxu0 0
    %974 = vmatpush1.bf16.msra.mxu0 0
    %975 = vmatprep.subr.bf16.mxu0 0
    %976 = vmatpush1.bf16.msra.mxu0 0
    %977 = vmatprep.subr.bf16.mxu0 0
    %978 = vmatpush1.bf16.msra.mxu0 0
    %979 = vmatprep.subr.bf16.mxu0 0
    %980 = vmatpush1.bf16.msra.mxu0 0
    %981 = vmatprep.subr.bf16.mxu0 0
    %982 = vmatpush1.bf16.msra.mxu0 0
    %983 = vmatprep.subr.bf16.mxu0 0
    %984 = vmatpush1.bf16.msra.mxu0 0
    %985 = vmatprep.subr.bf16.mxu0 0
    %986 = vmatpush1.bf16.msra.mxu0 0
    %987 = vmatprep.mubr.bf16.mxu0 0
    %988 = vmatmul.mubr.bf16.gmra.mrb[0].mxu0 %v907
    %v989 = vpop.f32.mrb[0].mxu0
    %v990 = vadd.f32 %v950, %v989
    %v991 = vpop.f32.mrb[0].mxu0
    %v992 = vpop.f32.mrb[0].mxu0
    %v993 = vpop.f32.mrb[0].mxu0
    %994 = vdwg.mxu0
    %v995 = vadd.f32 %v990, %v195
    %v996 = vxor.u32 %v995, 2147483648
    %v997 = vmul.f32 %v996, 1.442695
    %v998 = vpow.pop %v997
    %v999 = vadd.f32 %v998, 1.0
    %v1000 = vrcp.pop %v999
    %v1001 = vmul.f32 1.0, %v1000
    %v1002 = vtanh.pop %v995
    %v1003 = vmul.f32 %v1001, %v899
    %1005 = vrot.lane.b32.xlu0 %v1002, 32
    %v1006 = vpop.permute.xlu0 %1005
    %v1008 = vmul.f32 %v1001, %v1006
    %1010 = vrot.lane.b32.xlu0 %v1008, 32
    %v1011 = vpop.permute.xlu0 %1010
    %v1013 = vadd.f32 %v1003, %v1011
    %v1014 = vtanh.pop %v1013
    %1016 = vrot.lane.b32.xlu0 %v1014, 32
    %v1017 = vpop.permute.xlu0 %1016
    %v1019 = vmul.f32 %v1001, %v1017
    %v1020 = vpack.c.bf16 %v1019, %v1019
    %v1021 = vld [vmem:[%s4] sm:$0xf]
    %v1022 = vld [vmem:[%s4 + $0x4] sm:$0xf]
    %v1023 = vld [vmem:[%s4 + $0x8] sm:$0xf]
    %v1024 = vld [vmem:[%s4 + $0xc] sm:$0xf]
    %v1025 = vld [vmem:[%s5] sm:$0x1]
    %v1027 = vlaneseq
    %v1028 = vshrl.u32 %v1027, 7
    %v1029 = vsub.s32 0, %v1028
    %v1030 = vrot.slane %v1025, %v1029
    %1033 = vrot.lane.b32.xlu0 %v1020, 64
    %v1034 = vpop.permute.xlu0 %1033
    %v1039 = vunpack.c.l.b16 %v1021
    %v1040 = vunpack.c.l.b16 %v1022
    %v1041 = vunpack.c.l.b16 %v1023
    %v1042 = vunpack.c.l.b16 %v1024
    %v1043 = vpack.c.b16 %v1040, %v1039
    %v1044 = vpack.c.b16 %v1042, %v1041
    %v1048 = vsel %vm58, %v1034, 0
    %1050 = vmatprep.subr.bf16.mxu0 0
    %1051 = vmatpush1.bf16.msra.mxu0 %v1043
    %1052 = vmatprep.subr.bf16.mxu0 0
    %1053 = vmatpush1.bf16.msra.mxu0 %v1044
    %1054 = vmatprep.subr.bf16.mxu0 0
    %1055 = vmatpush1.bf16.msra.mxu0 0
    %1056 = vmatprep.subr.bf16.mxu0 0
    %1057 = vmatpush1.bf16.msra.mxu0 0
    %1058 = vmatprep.subr.bf16.mxu0 0
    %1059 = vmatpush1.bf16.msra.mxu0 0
    %1060 = vmatprep.subr.bf16.mxu0 0
    %1061 = vmatpush1.bf16.msra.mxu0 0
    %1062 = vmatprep.subr.bf16.mxu0 0
    %1063 = vmatpush1.bf16.msra.mxu0 0
    %1064 = vmatprep.subr.bf16.mxu0 0
    %1065 = vmatpush1.bf16.msra.mxu0 0
    %1066 = vmatprep.subr.bf16.mxu0 0
    %1067 = vmatpush1.bf16.msra.mxu0 0
    %1068 = vmatprep.subr.bf16.mxu0 0
    %1069 = vmatpush1.bf16.msra.mxu0 0
    %1070 = vmatprep.subr.bf16.mxu0 0
    %1071 = vmatpush1.bf16.msra.mxu0 0
    %1072 = vmatprep.subr.bf16.mxu0 0
    %1073 = vmatpush1.bf16.msra.mxu0 0
    %1074 = vmatprep.subr.bf16.mxu0 0
    %1075 = vmatpush1.bf16.msra.mxu0 0
    %1076 = vmatprep.subr.bf16.mxu0 0
    %1077 = vmatpush1.bf16.msra.mxu0 0
    %1078 = vmatprep.subr.bf16.mxu0 0
    %1079 = vmatpush1.bf16.msra.mxu0 0
    %1080 = vmatprep.subr.bf16.mxu0 0
    %1081 = vmatpush1.bf16.msra.mxu0 0
    %1082 = vmatprep.mubr.bf16.mxu0 0
    %1083 = vmatmul.mubr.bf16.gmra.mrb[0].mxu0 %v1048
    %v1084 = vpop.f32.mrb[0].mxu0
    %v1085 = vadd.f32 %v1030, %v1084
    %v1086 = vpop.f32.mrb[0].mxu0
    %v1087 = vpop.f32.mrb[0].mxu0
    %v1088 = vpop.f32.mrb[0].mxu0
    %1089 = vdwg.mxu0
    %1090 = vst [vmem:[#allocation2] sm:$0x3] %v1085
    // Predicated region
    $region26: #{spatial_ext_lstm_forward.1} parent=1 // pred_check
      _
    $region27: #{spatial_ext_lstm_forward.1} parent=1 // pred_check_branch
      %1092 = sbr.rel (0) target = $region29
    $region28: #{spatial_ext_lstm_forward.1} parent=1 // pred_region
      %s1094 = ssub.s32 32, 32
      %1095 = vsyncadd [#allocation3], %s1094
      %s1097 = sshll.u32 [#allocation2], 4
      %s1098 = int_to_ptr.vmem [resolvable:$true] %s1097
      %1100 = dma.vmem_to_hbm [thread:$0]  %s1098, 32, %s6, [#allocation3]
    $region29: #{spatial_ext_lstm_forward.1} parent=1 // pred_fallthru
      _
    // Predicated region
    $region30: #{spatial_ext_lstm_forward.1} parent=1 // pred_check
      _
    $region31: #{spatial_ext_lstm_forward.1} parent=1 // pred_check_branch
      %1102 = sbr.rel (0) target = $region33
    $region32: #{spatial_ext_lstm_forward.1} parent=1 // pred_region
      %1103 = dma.done [#allocation3], 32
    $region33: #{spatial_ext_lstm_forward.1} parent=1 // pred_fallthru
      _
    %1104 = vsyncpa [#allocation3], 1

</llo_original>
